<compile_context>
chip_gen: v5e
topology: v5e:2x2
jax: 0.10.0
libtpu: 0.0.40
codegen_flags: <defaults>
</compile_context>

<pallas_src>
import functools

import jax
import jax.numpy as jnp
from jax.experimental import pallas as pl
from jax.experimental.pallas import tpu as pltpu


def _residual_conv_kernel(x_ref, w_ref, b_ref, o_ref, xp_ref, *, K, H, W, C, pad):
    # x_ref : (1, C, H*W)       flat-spatial image for this batch element (lane-dense)
    # w_ref : (C, K*K*C)        im2col weights, row-major over (kh, kw, ci)
    # b_ref : (C, 1) f32        conv bias
    # o_ref : (1, C, H*W)       flat-spatial output (lane-dense)
    # xp_ref: (C, Hp*Wp) VMEM   replication-padded image, flat row-major over (row, col)
    Wp = W + 2 * pad
    Hp = H + 2 * pad
    M = (H - 1) * Wp + W                                   # flat output span (with gaps)

    # ---- ReplicationPad2d: one (C, Wp) store per padded row, all offsets static --------
    for j in range(Hp):
        src = min(max(j - pad, 0), H - 1)                  # static python int
        row = x_ref[0, :, src * W:(src + 1) * W]           # (C, W) lane-dense load
        if pad > 0:                                        # replicate left/right columns
            row = jnp.concatenate(
                [row[:, :1]] * pad + [row] + [row[:, W - 1:]] * pad, axis=1)
        xp_ref[:, j * Wp:(j + 1) * Wp] = row               # single store per padded row

    # ---- im2col: stack the K*K shifted windows along the contraction (sublane) axis ----
    windows = []
    for kh in range(K):
        for kw in range(K):
            off = kh * Wp + kw                             # static python int
            windows.append(xp_ref[:, off:off + M])         # (C, M), lane-dense
    xp2 = jnp.concatenate(windows, axis=0) if len(windows) > 1 else windows[0]

    # ---- one MXU dot (contraction K*K*C), f32 accumulation kept in registers ------------
    acc = jnp.dot(w_ref[...], xp2, preferred_element_type=jnp.float32)   # (C, M)

    # ---- bias + residual, one vectorized VPU add over the whole slab --------------------
    # The centre tap window (kh = kw = pad) is exactly x in the gapped flat layout.
    centre = windows[pad * K + pad].astype(jnp.float32)
    acc = acc + b_ref[...] + centre                        # (C, M), non_linearity = Identity

    # ---- compact away the 2*pad gap columns per row and store ---------------------------
    # TODO(synk): a fully gap-free layout would allow one single slab store here; with the
    # flat-window formulation this stays H static-slice stores (adds are already fused above).
    for h in range(H):
        o_ref[0, :, h * W:(h + 1) * W] = acc[:, h * Wp: h * Wp + W].astype(o_ref.dtype)


def synthesis_residual_layer(x_nchw, weight_oihw, bias):
    """Forward of SynthesisResidualLayer. x_nchw: [N, C, H, W] (PyTorch layout)."""
    N, C, H, W = x_nchw.shape
    Cout, Cin, K, K2 = weight_oihw.shape
    assert Cout == Cin == C and K == K2, "residual layer requires in/out channels to match"
    assert K % 2 == 1, "ReplicationPad2d((K-1)//2)+Conv2d is size-preserving only for odd K"
    pad = (K - 1) // 2
    Wp, Hp, HW = W + 2 * pad, H + 2 * pad, H * W

    # Layout prep: metadata-only reshape (no transpose, no extra HBM pass) + tiny weight
    # transform: w2[co, (kh*K+kw)*Cin + ci] = weight[co, ci, kh, kw].
    xf = x_nchw.reshape(N, C, HW)
    w2 = jnp.transpose(weight_oihw, (0, 2, 3, 1)).reshape(C, K * K * C)
    b2 = bias.reshape(C, 1).astype(jnp.float32)

    kernel = functools.partial(_residual_conv_kernel, K=K, H=H, W=W, C=C, pad=pad)

    # VMEM budget: x + out blocks are double-buffered; only override the default scoped
    # limit when the image is actually big (keeps the small-shape path untouched).
    itemsize = x_nchw.dtype.itemsize
    vmem_need = (4 * C * HW + C * Hp * Wp) * itemsize + (2 << 20)
    compiler_kwargs = dict(dimension_semantics=("parallel",))   # megacore split on batch
    if vmem_need > (12 << 20):
        # TODO(synk): for very large H*W switch to row+halo blocking via
        # memory_space=pl.ANY + manual pltpu.make_async_copy instead of a resident image.
        compiler_kwargs["vmem_limit_bytes"] = int(min(vmem_need, 64 << 20))

    out_flat = pl.pallas_call(
        kernel,
        out_shape=jax.ShapeDtypeStruct((N, C, HW), x_nchw.dtype),
        grid=(N,),
        in_specs=[
            pl.BlockSpec((1, C, HW), lambda n: (n, 0, 0)),
            pl.BlockSpec((C, K * K * C), lambda n: (0, 0)),
            pl.BlockSpec((C, 1), lambda n: (0, 0)),
        ],
        out_specs=pl.BlockSpec((1, C, HW), lambda n: (n, 0, 0)),
        scratch_shapes=[pltpu.VMEM((C, Hp * Wp), x_nchw.dtype)],
        compiler_params=pltpu.CompilerParams(**compiler_kwargs),
    )(xf, w2, b2)

    return out_flat.reshape(N, C, H, W)                    # metadata-only reshape


def _reference(x_nchw, weight_oihw, bias):
    """Pure-JAX reference of the PyTorch forward (for correctness checking)."""
    K = weight_oihw.shape[2]
    pad = (K - 1) // 2
    xpad = jnp.pad(x_nchw, ((0, 0), (0, 0), (pad, pad), (pad, pad)), mode="edge")
    conv = jax.lax.conv_general_dilated(
        xpad, weight_oihw, window_strides=(1, 1), padding="VALID",
        dimension_numbers=("NCHW", "OIHW", "NCHW"))
    return conv + bias[None, :, None, None] + x_nchw


if __name__ == "__main__":
    N, C, H, W = 2, 4, 16, 16
    K = 3

    key = jax.random.PRNGKey(0)
    kx, kw, kb = jax.random.split(key, 3)
    x = jax.random.normal(kx, (N, C, H, W), dtype=jnp.float32)

    fwd = jax.jit(synthesis_residual_layer)

    # Faithful module init: conv weight and bias are zeroed in __init__ -> forward == identity.
    w_zero = jnp.zeros((C, C, K, K), dtype=jnp.float32)
    b_zero = jnp.zeros((C,), dtype=jnp.float32)
    out = jax.block_until_ready(fwd(x, w_zero, b_zero))
    assert out.shape == x.shape
    assert jnp.allclose(out, x, atol=1e-6), "zero-weight residual must equal input"

    # Conv path sanity check with non-zero deterministic weights.
    w_rand = 0.1 * jax.random.normal(kw, (C, C, K, K), dtype=jnp.float32)
    b_rand = 0.1 * jax.random.normal(kb, (C,), dtype=jnp.float32)
    out2 = jax.block_until_ready(fwd(x, w_rand, b_rand))
    ref2 = _reference(x, w_rand, b_rand)
    assert jnp.allclose(out2, ref2, rtol=1e-4, atol=1e-4), "conv path mismatch vs reference"

    print("KERNEL_OK")
</pallas_src>

<mosaic_0001>
module attributes {stable_mosaic.version = 11 : i64} {
  func.func @_residual_conv_kernel(%arg0: i32, %arg1: memref<1x4x256xf32, #tpu.memory_space<vmem>>, %arg2: memref<4x36xf32, #tpu.memory_space<vmem>>, %arg3: memref<4x1xf32, #tpu.memory_space<vmem>>, %arg4: memref<1x4x256xf32, #tpu.memory_space<vmem>>, %arg5: memref<4x324xf32, #tpu.memory_space<vmem>>) attributes {dimension_semantics = [#tpu.dimension_semantics<parallel>], iteration_bounds = array<i64: 2>, scalar_prefetch = 0 : i64, scratch_operands = 1 : i64, tpu.core_type = #tpu.core_type<tc>, window_params = [{transform_indices = @transform_0, window_bounds = array<i64: 1, 4, 256>}, {pipeline_mode = #tpu.pipeline_mode<synchronous>, transform_indices = @transform_1, window_bounds = array<i64: 4, 36>}, {pipeline_mode = #tpu.pipeline_mode<synchronous>, transform_indices = @transform_2, window_bounds = array<i64: 4, 1>}, {transform_indices = @transform_3, window_bounds = array<i64: 1, 4, 256>}]} {
    %c0 = arith.constant 0 : index
    %c0_0 = arith.constant 0 : index
    %c0_1 = arith.constant 0 : index
    %0 = vector.load %arg1[%c0, %c0_0, %c0_1] : memref<1x4x256xf32, #tpu.memory_space<vmem>>, vector<1x4x16xf32>
    %1 = vector.shape_cast %0 : vector<1x4x16xf32> to vector<4x16xf32>
    %2 = vector.extract_strided_slice %1 {offsets = [0, 0], sizes = [4, 1], strides = [1, 1]} : vector<4x16xf32> to vector<4x1xf32>
    %3 = vector.extract_strided_slice %1 {offsets = [0, 15], sizes = [4, 1], strides = [1, 1]} : vector<4x16xf32> to vector<4x1xf32>
    %4 = tpu.concatenate %2, %1, %3 in 1 : vector<4x1xf32>, vector<4x16xf32>, vector<4x1xf32> -> vector<4x18xf32>
    %c0_2 = arith.constant 0 : index
    %c0_3 = arith.constant 0 : index
    %5 = vector.load %arg5[%c0_2, %c0_3] : memref<4x324xf32, #tpu.memory_space<vmem>>, vector<4x18xf32>
    tpu.vector_store %arg5[%c0_2, %c0_3], %4 {strides = array<i32>} : memref<4x324xf32, #tpu.memory_space<vmem>>, vector<4x18xf32>,
    %c0_4 = arith.constant 0 : index
    %c0_5 = arith.constant 0 : index
    %c0_6 = arith.constant 0 : index
    %6 = vector.load %arg1[%c0_4, %c0_5, %c0_6] : memref<1x4x256xf32, #tpu.memory_space<vmem>>, vector<1x4x16xf32>
    %7 = vector.shape_cast %6 : vector<1x4x16xf32> to vector<4x16xf32>
    %8 = vector.extract_strided_slice %7 {offsets = [0, 0], sizes = [4, 1], strides = [1, 1]} : vector<4x16xf32> to vector<4x1xf32>
    %9 = vector.extract_strided_slice %7 {offsets = [0, 15], sizes = [4, 1], strides = [1, 1]} : vector<4x16xf32> to vector<4x1xf32>
    %10 = tpu.concatenate %8, %7, %9 in 1 : vector<4x1xf32>, vector<4x16xf32>, vector<4x1xf32> -> vector<4x18xf32>
    %c0_7 = arith.constant 0 : index
    %c18 = arith.constant 18 : index
    %11 = vector.load %arg5[%c0_7, %c18] : memref<4x324xf32, #tpu.memory_space<vmem>>, vector<4x18xf32>
    tpu.vector_store %arg5[%c0_7, %c18], %10 {strides = array<i32>} : memref<4x324xf32, #tpu.memory_space<vmem>>, vector<4x18xf32>,
    %c0_8 = arith.constant 0 : index
    %c0_9 = arith.constant 0 : index
    %c16 = arith.constant 16 : index
    %12 = vector.load %arg1[%c0_8, %c0_9, %c16] : memref<1x4x256xf32, #tpu.memory_space<vmem>>, vector<1x4x16xf32>
    %13 = vector.shape_cast %12 : vector<1x4x16xf32> to vector<4x16xf32>
    %14 = vector.extract_strided_slice %13 {offsets = [0, 0], sizes = [4, 1], strides = [1, 1]} : vector<4x16xf32> to vector<4x1xf32>
    %15 = vector.extract_strided_slice %13 {offsets = [0, 15], sizes = [4, 1], strides = [1, 1]} : vector<4x16xf32> to vector<4x1xf32>
    %16 = tpu.concatenate %14, %13, %15 in 1 : vector<4x1xf32>, vector<4x16xf32>, vector<4x1xf32> -> vector<4x18xf32>
    %c0_10 = arith.constant 0 : index
    %c36 = arith.constant 36 : index
    %17 = vector.load %arg5[%c0_10, %c36] : memref<4x324xf32, #tpu.memory_space<vmem>>, vector<4x18xf32>
    tpu.vector_store %arg5[%c0_10, %c36], %16 {strides = array<i32>} : memref<4x324xf32, #tpu.memory_space<vmem>>, vector<4x18xf32>,
    %c0_11 = arith.constant 0 : index
    %c0_12 = arith.constant 0 : index
    %c32 = arith.constant 32 : index
    %18 = vector.load %arg1[%c0_11, %c0_12, %c32] : memref<1x4x256xf32, #tpu.memory_space<vmem>>, vector<1x4x16xf32>
    %19 = vector.shape_cast %18 : vector<1x4x16xf32> to vector<4x16xf32>
    %20 = vector.extract_strided_slice %19 {offsets = [0, 0], sizes = [4, 1], strides = [1, 1]} : vector<4x16xf32> to vector<4x1xf32>
    %21 = vector.extract_strided_slice %19 {offsets = [0, 15], sizes = [4, 1], strides = [1, 1]} : vector<4x16xf32> to vector<4x1xf32>
    %22 = tpu.concatenate %20, %19, %21 in 1 : vector<4x1xf32>, vector<4x16xf32>, vector<4x1xf32> -> vector<4x18xf32>
    %c0_13 = arith.constant 0 : index
    %c54 = arith.constant 54 : index
    %23 = vector.load %arg5[%c0_13, %c54] : memref<4x324xf32, #tpu.memory_space<vmem>>, vector<4x18xf32>
    tpu.vector_store %arg5[%c0_13, %c54], %22 {strides = array<i32>} : memref<4x324xf32, #tpu.memory_space<vmem>>, vector<4x18xf32>,
    %c0_14 = arith.constant 0 : index
    %c0_15 = arith.constant 0 : index
    %c48 = arith.constant 48 : index
    %24 = vector.load %arg1[%c0_14, %c0_15, %c48] : memref<1x4x256xf32, #tpu.memory_space<vmem>>, vector<1x4x16xf32>
    %25 = vector.shape_cast %24 : vector<1x4x16xf32> to vector<4x16xf32>
    %26 = vector.extract_strided_slice %25 {offsets = [0, 0], sizes = [4, 1], strides = [1, 1]} : vector<4x16xf32> to vector<4x1xf32>
    %27 = vector.extract_strided_slice %25 {offsets = [0, 15], sizes = [4, 1], strides = [1, 1]} : vector<4x16xf32> to vector<4x1xf32>
    %28 = tpu.concatenate %26, %25, %27 in 1 : vector<4x1xf32>, vector<4x16xf32>, vector<4x1xf32> -> vector<4x18xf32>
    %c0_16 = arith.constant 0 : index
    %c72 = arith.constant 72 : index
    %29 = vector.load %arg5[%c0_16, %c72] : memref<4x324xf32, #tpu.memory_space<vmem>>, vector<4x18xf32>
    tpu.vector_store %arg5[%c0_16, %c72], %28 {strides = array<i32>} : memref<4x324xf32, #tpu.memory_space<vmem>>, vector<4x18xf32>,
    %c0_17 = arith.constant 0 : index
    %c0_18 = arith.constant 0 : index
    %c64 = arith.constant 64 : index
    %30 = vector.load %arg1[%c0_17, %c0_18, %c64] : memref<1x4x256xf32, #tpu.memory_space<vmem>>, vector<1x4x16xf32>
    %31 = vector.shape_cast %30 : vector<1x4x16xf32> to vector<4x16xf32>
    %32 = vector.extract_strided_slice %31 {offsets = [0, 0], sizes = [4, 1], strides = [1, 1]} : vector<4x16xf32> to vector<4x1xf32>
    %33 = vector.extract_strided_slice %31 {offsets = [0, 15], sizes = [4, 1], strides = [1, 1]} : vector<4x16xf32> to vector<4x1xf32>
    %34 = tpu.concatenate %32, %31, %33 in 1 : vector<4x1xf32>, vector<4x16xf32>, vector<4x1xf32> -> vector<4x18xf32>
    %c0_19 = arith.constant 0 : index
    %c90 = arith.constant 90 : index
    %35 = vector.load %arg5[%c0_19, %c90] : memref<4x324xf32, #tpu.memory_space<vmem>>, vector<4x18xf32>
    tpu.vector_store %arg5[%c0_19, %c90], %34 {strides = array<i32>} : memref<4x324xf32, #tpu.memory_space<vmem>>, vector<4x18xf32>,
    %c0_20 = arith.constant 0 : index
    %c0_21 = arith.constant 0 : index
    %c80 = arith.constant 80 : index
    %36 = vector.load %arg1[%c0_20, %c0_21, %c80] : memref<1x4x256xf32, #tpu.memory_space<vmem>>, vector<1x4x16xf32>
    %37 = vector.shape_cast %36 : vector<1x4x16xf32> to vector<4x16xf32>
    %38 = vector.extract_strided_slice %37 {offsets = [0, 0], sizes = [4, 1], strides = [1, 1]} : vector<4x16xf32> to vector<4x1xf32>
    %39 = vector.extract_strided_slice %37 {offsets = [0, 15], sizes = [4, 1], strides = [1, 1]} : vector<4x16xf32> to vector<4x1xf32>
    %40 = tpu.concatenate %38, %37, %39 in 1 : vector<4x1xf32>, vector<4x16xf32>, vector<4x1xf32> -> vector<4x18xf32>
    %c0_22 = arith.constant 0 : index
    %c108 = arith.constant 108 : index
    %41 = vector.load %arg5[%c0_22, %c108] : memref<4x324xf32, #tpu.memory_space<vmem>>, vector<4x18xf32>
    tpu.vector_store %arg5[%c0_22, %c108], %40 {strides = array<i32>} : memref<4x324xf32, #tpu.memory_space<vmem>>, vector<4x18xf32>,
    %c0_23 = arith.constant 0 : index
    %c0_24 = arith.constant 0 : index
    %c96 = arith.constant 96 : index
    %42 = vector.load %arg1[%c0_23, %c0_24, %c96] : memref<1x4x256xf32, #tpu.memory_space<vmem>>, vector<1x4x16xf32>
    %43 = vector.shape_cast %42 : vector<1x4x16xf32> to vector<4x16xf32>
    %44 = vector.extract_strided_slice %43 {offsets = [0, 0], sizes = [4, 1], strides = [1, 1]} : vector<4x16xf32> to vector<4x1xf32>
    %45 = vector.extract_strided_slice %43 {offsets = [0, 15], sizes = [4, 1], strides = [1, 1]} : vector<4x16xf32> to vector<4x1xf32>
    %46 = tpu.concatenate %44, %43, %45 in 1 : vector<4x1xf32>, vector<4x16xf32>, vector<4x1xf32> -> vector<4x18xf32>
    %c0_25 = arith.constant 0 : index
    %c126 = arith.constant 126 : index
    %47 = vector.load %arg5[%c0_25, %c126] : memref<4x324xf32, #tpu.memory_space<vmem>>, vector<4x18xf32>
    tpu.vector_store %arg5[%c0_25, %c126], %46 {strides = array<i32>} : memref<4x324xf32, #tpu.memory_space<vmem>>, vector<4x18xf32>,
    %c0_26 = arith.constant 0 : index
    %c0_27 = arith.constant 0 : index
    %c112 = arith.constant 112 : index
    %48 = vector.load %arg1[%c0_26, %c0_27, %c112] : memref<1x4x256xf32, #tpu.memory_space<vmem>>, vector<1x4x16xf32>
    %49 = vector.shape_cast %48 : vector<1x4x16xf32> to vector<4x16xf32>
    %50 = vector.extract_strided_slice %49 {offsets = [0, 0], sizes = [4, 1], strides = [1, 1]} : vector<4x16xf32> to vector<4x1xf32>
    %51 = vector.extract_strided_slice %49 {offsets = [0, 15], sizes = [4, 1], strides = [1, 1]} : vector<4x16xf32> to vector<4x1xf32>
    %52 = tpu.concatenate %50, %49, %51 in 1 : vector<4x1xf32>, vector<4x16xf32>, vector<4x1xf32> -> vector<4x18xf32>
    %c0_28 = arith.constant 0 : index
    %c144 = arith.constant 144 : index
    %53 = vector.load %arg5[%c0_28, %c144] : memref<4x324xf32, #tpu.memory_space<vmem>>, vector<4x18xf32>
    tpu.vector_store %arg5[%c0_28, %c144], %52 {strides = array<i32>} : memref<4x324xf32, #tpu.memory_space<vmem>>, vector<4x18xf32>,
    %c0_29 = arith.constant 0 : index
    %c0_30 = arith.constant 0 : index
    %c128 = arith.constant 128 : index
    %54 = vector.load %arg1[%c0_29, %c0_30, %c128] : memref<1x4x256xf32, #tpu.memory_space<vmem>>, vector<1x4x16xf32>
    %55 = vector.shape_cast %54 : vector<1x4x16xf32> to vector<4x16xf32>
    %56 = vector.extract_strided_slice %55 {offsets = [0, 0], sizes = [4, 1], strides = [1, 1]} : vector<4x16xf32> to vector<4x1xf32>
    %57 = vector.extract_strided_slice %55 {offsets = [0, 15], sizes = [4, 1], strides = [1, 1]} : vector<4x16xf32> to vector<4x1xf32>
    %58 = tpu.concatenate %56, %55, %57 in 1 : vector<4x1xf32>, vector<4x16xf32>, vector<4x1xf32> -> vector<4x18xf32>
    %c0_31 = arith.constant 0 : index
    %c162 = arith.constant 162 : index
    %59 = vector.load %arg5[%c0_31, %c162] : memref<4x324xf32, #tpu.memory_space<vmem>>, vector<4x18xf32>
    tpu.vector_store %arg5[%c0_31, %c162], %58 {strides = array<i32>} : memref<4x324xf32, #tpu.memory_space<vmem>>, vector<4x18xf32>,
    %c0_32 = arith.constant 0 : index
    %c0_33 = arith.constant 0 : index
    %c144_34 = arith.constant 144 : index
    %60 = vector.load %arg1[%c0_32, %c0_33, %c144_34] : memref<1x4x256xf32, #tpu.memory_space<vmem>>, vector<1x4x16xf32>
    %61 = vector.shape_cast %60 : vector<1x4x16xf32> to vector<4x16xf32>
    %62 = vector.extract_strided_slice %61 {offsets = [0, 0], sizes = [4, 1], strides = [1, 1]} : vector<4x16xf32> to vector<4x1xf32>
    %63 = vector.extract_strided_slice %61 {offsets = [0, 15], sizes = [4, 1], strides = [1, 1]} : vector<4x16xf32> to vector<4x1xf32>
    %64 = tpu.concatenate %62, %61, %63 in 1 : vector<4x1xf32>, vector<4x16xf32>, vector<4x1xf32> -> vector<4x18xf32>
    %c0_35 = arith.constant 0 : index
    %c180 = arith.constant 180 : index
    %65 = vector.load %arg5[%c0_35, %c180] : memref<4x324xf32, #tpu.memory_space<vmem>>, vector<4x18xf32>
    tpu.vector_store %arg5[%c0_35, %c180], %64 {strides = array<i32>} : memref<4x324xf32, #tpu.memory_space<vmem>>, vector<4x18xf32>,
    %c0_36 = arith.constant 0 : index
    %c0_37 = arith.constant 0 : index
    %c160 = arith.constant 160 : index
    %66 = vector.load %arg1[%c0_36, %c0_37, %c160] : memref<1x4x256xf32, #tpu.memory_space<vmem>>, vector<1x4x16xf32>
    %67 = vector.shape_cast %66 : vector<1x4x16xf32> to vector<4x16xf32>
    %68 = vector.extract_strided_slice %67 {offsets = [0, 0], sizes = [4, 1], strides = [1, 1]} : vector<4x16xf32> to vector<4x1xf32>
    %69 = vector.extract_strided_slice %67 {offsets = [0, 15], sizes = [4, 1], strides = [1, 1]} : vector<4x16xf32> to vector<4x1xf32>
    %70 = tpu.concatenate %68, %67, %69 in 1 : vector<4x1xf32>, vector<4x16xf32>, vector<4x1xf32> -> vector<4x18xf32>
    %c0_38 = arith.constant 0 : index
    %c198 = arith.constant 198 : index
    %71 = vector.load %arg5[%c0_38, %c198] : memref<4x324xf32, #tpu.memory_space<vmem>>, vector<4x18xf32>
    tpu.vector_store %arg5[%c0_38, %c198], %70 {strides = array<i32>} : memref<4x324xf32, #tpu.memory_space<vmem>>, vector<4x18xf32>,
    %c0_39 = arith.constant 0 : index
    %c0_40 = arith.constant 0 : index
    %c176 = arith.constant 176 : index
    %72 = vector.load %arg1[%c0_39, %c0_40, %c176] : memref<1x4x256xf32, #tpu.memory_space<vmem>>, vector<1x4x16xf32>
    %73 = vector.shape_cast %72 : vector<1x4x16xf32> to vector<4x16xf32>
    %74 = vector.extract_strided_slice %73 {offsets = [0, 0], sizes = [4, 1], strides = [1, 1]} : vector<4x16xf32> to vector<4x1xf32>
    %75 = vector.extract_strided_slice %73 {offsets = [0, 15], sizes = [4, 1], strides = [1, 1]} : vector<4x16xf32> to vector<4x1xf32>
    %76 = tpu.concatenate %74, %73, %75 in 1 : vector<4x1xf32>, vector<4x16xf32>, vector<4x1xf32> -> vector<4x18xf32>
    %c0_41 = arith.constant 0 : index
    %c216 = arith.constant 216 : index
    %77 = vector.load %arg5[%c0_41, %c216] : memref<4x324xf32, #tpu.memory_space<vmem>>, vector<4x18xf32>
    tpu.vector_store %arg5[%c0_41, %c216], %76 {strides = array<i32>} : memref<4x324xf32, #tpu.memory_space<vmem>>, vector<4x18xf32>,
    %c0_42 = arith.constant 0 : index
    %c0_43 = arith.constant 0 : index
    %c192 = arith.constant 192 : index
    %78 = vector.load %arg1[%c0_42, %c0_43, %c192] : memref<1x4x256xf32, #tpu.memory_space<vmem>>, vector<1x4x16xf32>
    %79 = vector.shape_cast %78 : vector<1x4x16xf32> to vector<4x16xf32>
    %80 = vector.extract_strided_slice %79 {offsets = [0, 0], sizes = [4, 1], strides = [1, 1]} : vector<4x16xf32> to vector<4x1xf32>
    %81 = vector.extract_strided_slice %79 {offsets = [0, 15], sizes = [4, 1], strides = [1, 1]} : vector<4x16xf32> to vector<4x1xf32>
    %82 = tpu.concatenate %80, %79, %81 in 1 : vector<4x1xf32>, vector<4x16xf32>, vector<4x1xf32> -> vector<4x18xf32>
    %c0_44 = arith.constant 0 : index
    %c234 = arith.constant 234 : index
    %83 = vector.load %arg5[%c0_44, %c234] : memref<4x324xf32, #tpu.memory_space<vmem>>, vector<4x18xf32>
    tpu.vector_store %arg5[%c0_44, %c234], %82 {strides = array<i32>} : memref<4x324xf32, #tpu.memory_space<vmem>>, vector<4x18xf32>,
    %c0_45 = arith.constant 0 : index
    %c0_46 = arith.constant 0 : index
    %c208 = arith.constant 208 : index
    %84 = vector.load %arg1[%c0_45, %c0_46, %c208] : memref<1x4x256xf32, #tpu.memory_space<vmem>>, vector<1x4x16xf32>
    %85 = vector.shape_cast %84 : vector<1x4x16xf32> to vector<4x16xf32>
    %86 = vector.extract_strided_slice %85 {offsets = [0, 0], sizes = [4, 1], strides = [1, 1]} : vector<4x16xf32> to vector<4x1xf32>
    %87 = vector.extract_strided_slice %85 {offsets = [0, 15], sizes = [4, 1], strides = [1, 1]} : vector<4x16xf32> to vector<4x1xf32>
    %88 = tpu.concatenate %86, %85, %87 in 1 : vector<4x1xf32>, vector<4x16xf32>, vector<4x1xf32> -> vector<4x18xf32>
    %c0_47 = arith.constant 0 : index
    %c252 = arith.constant 252 : index
    %89 = vector.load %arg5[%c0_47, %c252] : memref<4x324xf32, #tpu.memory_space<vmem>>, vector<4x18xf32>
    tpu.vector_store %arg5[%c0_47, %c252], %88 {strides = array<i32>} : memref<4x324xf32, #tpu.memory_space<vmem>>, vector<4x18xf32>,
    %c0_48 = arith.constant 0 : index
    %c0_49 = arith.constant 0 : index
    %c224 = arith.constant 224 : index
    %90 = vector.load %arg1[%c0_48, %c0_49, %c224] : memref<1x4x256xf32, #tpu.memory_space<vmem>>, vector<1x4x16xf32>
    %91 = vector.shape_cast %90 : vector<1x4x16xf32> to vector<4x16xf32>
    %92 = vector.extract_strided_slice %91 {offsets = [0, 0], sizes = [4, 1], strides = [1, 1]} : vector<4x16xf32> to vector<4x1xf32>
    %93 = vector.extract_strided_slice %91 {offsets = [0, 15], sizes = [4, 1], strides = [1, 1]} : vector<4x16xf32> to vector<4x1xf32>
    %94 = tpu.concatenate %92, %91, %93 in 1 : vector<4x1xf32>, vector<4x16xf32>, vector<4x1xf32> -> vector<4x18xf32>
    %c0_50 = arith.constant 0 : index
    %c270 = arith.constant 270 : index
    %95 = vector.load %arg5[%c0_50, %c270] : memref<4x324xf32, #tpu.memory_space<vmem>>, vector<4x18xf32>
    tpu.vector_store %arg5[%c0_50, %c270], %94 {strides = array<i32>} : memref<4x324xf32, #tpu.memory_space<vmem>>, vector<4x18xf32>,
    %c0_51 = arith.constant 0 : index
    %c0_52 = arith.constant 0 : index
    %c240 = arith.constant 240 : index
    %96 = vector.load %arg1[%c0_51, %c0_52, %c240] : memref<1x4x256xf32, #tpu.memory_space<vmem>>, vector<1x4x16xf32>
    %97 = vector.shape_cast %96 : vector<1x4x16xf32> to vector<4x16xf32>
    %98 = vector.extract_strided_slice %97 {offsets = [0, 0], sizes = [4, 1], strides = [1, 1]} : vector<4x16xf32> to vector<4x1xf32>
    %99 = vector.extract_strided_slice %97 {offsets = [0, 15], sizes = [4, 1], strides = [1, 1]} : vector<4x16xf32> to vector<4x1xf32>
    %100 = tpu.concatenate %98, %97, %99 in 1 : vector<4x1xf32>, vector<4x16xf32>, vector<4x1xf32> -> vector<4x18xf32>
    %c0_53 = arith.constant 0 : index
    %c288 = arith.constant 288 : index
    %101 = vector.load %arg5[%c0_53, %c288] : memref<4x324xf32, #tpu.memory_space<vmem>>, vector<4x18xf32>
    tpu.vector_store %arg5[%c0_53, %c288], %100 {strides = array<i32>} : memref<4x324xf32, #tpu.memory_space<vmem>>, vector<4x18xf32>,
    %c0_54 = arith.constant 0 : index
    %c0_55 = arith.constant 0 : index
    %c240_56 = arith.constant 240 : index
    %102 = vector.load %arg1[%c0_54, %c0_55, %c240_56] : memref<1x4x256xf32, #tpu.memory_space<vmem>>, vector<1x4x16xf32>
    %103 = vector.shape_cast %102 : vector<1x4x16xf32> to vector<4x16xf32>
    %104 = vector.extract_strided_slice %103 {offsets = [0, 0], sizes = [4, 1], strides = [1, 1]} : vector<4x16xf32> to vector<4x1xf32>
    %105 = vector.extract_strided_slice %103 {offsets = [0, 15], sizes = [4, 1], strides = [1, 1]} : vector<4x16xf32> to vector<4x1xf32>
    %106 = tpu.concatenate %104, %103, %105 in 1 : vector<4x1xf32>, vector<4x16xf32>, vector<4x1xf32> -> vector<4x18xf32>
    %c0_57 = arith.constant 0 : index
    %c306 = arith.constant 306 : index
    %107 = vector.load %arg5[%c0_57, %c306] : memref<4x324xf32, #tpu.memory_space<vmem>>, vector<4x18xf32>
    tpu.vector_store %arg5[%c0_57, %c306], %106 {strides = array<i32>} : memref<4x324xf32, #tpu.memory_space<vmem>>, vector<4x18xf32>,
    %c0_58 = arith.constant 0 : index
    %c0_59 = arith.constant 0 : index
    %108 = vector.load %arg5[%c0_58, %c0_59] : memref<4x324xf32, #tpu.memory_space<vmem>>, vector<4x286xf32>
    %c0_60 = arith.constant 0 : index
    %c1 = arith.constant 1 : index
    %109 = vector.load %arg5[%c0_60, %c1] : memref<4x324xf32, #tpu.memory_space<vmem>>, vector<4x286xf32>
    %c0_61 = arith.constant 0 : index
    %c2 = arith.constant 2 : index
    %110 = vector.load %arg5[%c0_61, %c2] : memref<4x324xf32, #tpu.memory_space<vmem>>, vector<4x286xf32>
    %c0_62 = arith.constant 0 : index
    %c18_63 = arith.constant 18 : index
    %111 = vector.load %arg5[%c0_62, %c18_63] : memref<4x324xf32, #tpu.memory_space<vmem>>, vector<4x286xf32>
    %c0_64 = arith.constant 0 : index
    %c19 = arith.constant 19 : index
    %112 = vector.load %arg5[%c0_64, %c19] : memref<4x324xf32, #tpu.memory_space<vmem>>, vector<4x286xf32>
    %c0_65 = arith.constant 0 : index
    %c20 = arith.constant 20 : index
    %113 = vector.load %arg5[%c0_65, %c20] : memref<4x324xf32, #tpu.memory_space<vmem>>, vector<4x286xf32>
    %c0_66 = arith.constant 0 : index
    %c36_67 = arith.constant 36 : index
    %114 = vector.load %arg5[%c0_66, %c36_67] : memref<4x324xf32, #tpu.memory_space<vmem>>, vector<4x286xf32>
    %c0_68 = arith.constant 0 : index
    %c37 = arith.constant 37 : index
    %115 = vector.load %arg5[%c0_68, %c37] : memref<4x324xf32, #tpu.memory_space<vmem>>, vector<4x286xf32>
    %c0_69 = arith.constant 0 : index
    %c38 = arith.constant 38 : index
    %116 = vector.load %arg5[%c0_69, %c38] : memref<4x324xf32, #tpu.memory_space<vmem>>, vector<4x286xf32>
    %117 = tpu.concatenate %108, %109, %110, %111, %112, %113, %114, %115, %116 in 0 : vector<4x286xf32>, vector<4x286xf32>, vector<4x286xf32>, vector<4x286xf32>, vector<4x286xf32>, vector<4x286xf32>, vector<4x286xf32>, vector<4x286xf32>, vector<4x286xf32> -> vector<36x286xf32>
    %c0_70 = arith.constant 0 : index
    %c0_71 = arith.constant 0 : index
    %118 = vector.load %arg2[%c0_70, %c0_71] : memref<4x36xf32, #tpu.memory_space<vmem>>, vector<4x36xf32>
    %cst = arith.constant dense<0.000000e+00> : vector<4x286xf32>
    %119 = tpu.matmul %118, %117, %cst {dimension_numbers = #tpu.dot_dimension_numbers<[1], [0], [0], [1], [0, 0, 1, 1], [], []>} : vector<4x36xf32>, vector<36x286xf32>, vector<4x286xf32> -> vector<4x286xf32>
    %c0_72 = arith.constant 0 : index
    %c0_73 = arith.constant 0 : index
    %120 = vector.load %arg3[%c0_72, %c0_73] : memref<4x1xf32, #tpu.memory_space<vmem>>, vector<4x1xf32>
    %121 = vector.broadcast %120 : vector<4x1xf32> to vector<4x286xf32>
    %122 = arith.addf %119, %121 : vector<4x286xf32>
    %123 = arith.addf %122, %112 : vector<4x286xf32>
    %124 = vector.extract_strided_slice %123 {offsets = [0, 0], sizes = [4, 16], strides = [1, 1]} : vector<4x286xf32> to vector<4x16xf32>
    %c0_74 = arith.constant 0 : index
    %c0_75 = arith.constant 0 : index
    %c0_76 = arith.constant 0 : index
    %125 = vector.load %arg4[%c0_74, %c0_75, %c0_76] : memref<1x4x256xf32, #tpu.memory_space<vmem>>, vector<1x4x16xf32>
    %126 = vector.shape_cast %125 : vector<1x4x16xf32> to vector<4x16xf32>
    %127 = vector.shape_cast %124 : vector<4x16xf32> to vector<1x4x16xf32>
    tpu.vector_store %arg4[%c0_74, %c0_75, %c0_76], %127 {strides = array<i32>} : memref<1x4x256xf32, #tpu.memory_space<vmem>>, vector<1x4x16xf32>,
    %128 = vector.extract_strided_slice %123 {offsets = [0, 18], sizes = [4, 16], strides = [1, 1]} : vector<4x286xf32> to vector<4x16xf32>
    %c0_77 = arith.constant 0 : index
    %c0_78 = arith.constant 0 : index
    %c16_79 = arith.constant 16 : index
    %129 = vector.load %arg4[%c0_77, %c0_78, %c16_79] : memref<1x4x256xf32, #tpu.memory_space<vmem>>, vector<1x4x16xf32>
    %130 = vector.shape_cast %129 : vector<1x4x16xf32> to vector<4x16xf32>
    %131 = vector.shape_cast %128 : vector<4x16xf32> to vector<1x4x16xf32>
    tpu.vector_store %arg4[%c0_77, %c0_78, %c16_79], %131 {strides = array<i32>} : memref<1x4x256xf32, #tpu.memory_space<vmem>>, vector<1x4x16xf32>,
    %132 = vector.extract_strided_slice %123 {offsets = [0, 36], sizes = [4, 16], strides = [1, 1]} : vector<4x286xf32> to vector<4x16xf32>
    %c0_80 = arith.constant 0 : index
    %c0_81 = arith.constant 0 : index
    %c32_82 = arith.constant 32 : index
    %133 = vector.load %arg4[%c0_80, %c0_81, %c32_82] : memref<1x4x256xf32, #tpu.memory_space<vmem>>, vector<1x4x16xf32>
    %134 = vector.shape_cast %133 : vector<1x4x16xf32> to vector<4x16xf32>
    %135 = vector.shape_cast %132 : vector<4x16xf32> to vector<1x4x16xf32>
    tpu.vector_store %arg4[%c0_80, %c0_81, %c32_82], %135 {strides = array<i32>} : memref<1x4x256xf32, #tpu.memory_space<vmem>>, vector<1x4x16xf32>,
    %136 = vector.extract_strided_slice %123 {offsets = [0, 54], sizes = [4, 16], strides = [1, 1]} : vector<4x286xf32> to vector<4x16xf32>
    %c0_83 = arith.constant 0 : index
    %c0_84 = arith.constant 0 : index
    %c48_85 = arith.constant 48 : index
    %137 = vector.load %arg4[%c0_83, %c0_84, %c48_85] : memref<1x4x256xf32, #tpu.memory_space<vmem>>, vector<1x4x16xf32>
    %138 = vector.shape_cast %137 : vector<1x4x16xf32> to vector<4x16xf32>
    %139 = vector.shape_cast %136 : vector<4x16xf32> to vector<1x4x16xf32>
    tpu.vector_store %arg4[%c0_83, %c0_84, %c48_85], %139 {strides = array<i32>} : memref<1x4x256xf32, #tpu.memory_space<vmem>>, vector<1x4x16xf32>,
    %140 = vector.extract_strided_slice %123 {offsets = [0, 72], sizes = [4, 16], strides = [1, 1]} : vector<4x286xf32> to vector<4x16xf32>
    %c0_86 = arith.constant 0 : index
    %c0_87 = arith.constant 0 : index
    %c64_88 = arith.constant 64 : index
    %141 = vector.load %arg4[%c0_86, %c0_87, %c64_88] : memref<1x4x256xf32, #tpu.memory_space<vmem>>, vector<1x4x16xf32>
    %142 = vector.shape_cast %141 : vector<1x4x16xf32> to vector<4x16xf32>
    %143 = vector.shape_cast %140 : vector<4x16xf32> to vector<1x4x16xf32>
    tpu.vector_store %arg4[%c0_86, %c0_87, %c64_88], %143 {strides = array<i32>} : memref<1x4x256xf32, #tpu.memory_space<vmem>>, vector<1x4x16xf32>,
    %144 = vector.extract_strided_slice %123 {offsets = [0, 90], sizes = [4, 16], strides = [1, 1]} : vector<4x286xf32> to vector<4x16xf32>
    %c0_89 = arith.constant 0 : index
    %c0_90 = arith.constant 0 : index
    %c80_91 = arith.constant 80 : index
    %145 = vector.load %arg4[%c0_89, %c0_90, %c80_91] : memref<1x4x256xf32, #tpu.memory_space<vmem>>, vector<1x4x16xf32>
    %146 = vector.shape_cast %145 : vector<1x4x16xf32> to vector<4x16xf32>
    %147 = vector.shape_cast %144 : vector<4x16xf32> to vector<1x4x16xf32>
    tpu.vector_store %arg4[%c0_89, %c0_90, %c80_91], %147 {strides = array<i32>} : memref<1x4x256xf32, #tpu.memory_space<vmem>>, vector<1x4x16xf32>,
    %148 = vector.extract_strided_slice %123 {offsets = [0, 108], sizes = [4, 16], strides = [1, 1]} : vector<4x286xf32> to vector<4x16xf32>
    %c0_92 = arith.constant 0 : index
    %c0_93 = arith.constant 0 : index
    %c96_94 = arith.constant 96 : index
    %149 = vector.load %arg4[%c0_92, %c0_93, %c96_94] : memref<1x4x256xf32, #tpu.memory_space<vmem>>, vector<1x4x16xf32>
    %150 = vector.shape_cast %149 : vector<1x4x16xf32> to vector<4x16xf32>
    %151 = vector.shape_cast %148 : vector<4x16xf32> to vector<1x4x16xf32>
    tpu.vector_store %arg4[%c0_92, %c0_93, %c96_94], %151 {strides = array<i32>} : memref<1x4x256xf32, #tpu.memory_space<vmem>>, vector<1x4x16xf32>,
    %152 = vector.extract_strided_slice %123 {offsets = [0, 126], sizes = [4, 16], strides = [1, 1]} : vector<4x286xf32> to vector<4x16xf32>
    %c0_95 = arith.constant 0 : index
    %c0_96 = arith.constant 0 : index
    %c112_97 = arith.constant 112 : index
    %153 = vector.load %arg4[%c0_95, %c0_96, %c112_97] : memref<1x4x256xf32, #tpu.memory_space<vmem>>, vector<1x4x16xf32>
    %154 = vector.shape_cast %153 : vector<1x4x16xf32> to vector<4x16xf32>
    %155 = vector.shape_cast %152 : vector<4x16xf32> to vector<1x4x16xf32>
    tpu.vector_store %arg4[%c0_95, %c0_96, %c112_97], %155 {strides = array<i32>} : memref<1x4x256xf32, #tpu.memory_space<vmem>>, vector<1x4x16xf32>,
    %156 = vector.extract_strided_slice %123 {offsets = [0, 144], sizes = [4, 16], strides = [1, 1]} : vector<4x286xf32> to vector<4x16xf32>
    %c0_98 = arith.constant 0 : index
    %c0_99 = arith.constant 0 : index
    %c128_100 = arith.constant 128 : index
    %157 = vector.load %arg4[%c0_98, %c0_99, %c128_100] : memref<1x4x256xf32, #tpu.memory_space<vmem>>, vector<1x4x16xf32>
    %158 = vector.shape_cast %157 : vector<1x4x16xf32> to vector<4x16xf32>
    %159 = vector.shape_cast %156 : vector<4x16xf32> to vector<1x4x16xf32>
    tpu.vector_store %arg4[%c0_98, %c0_99, %c128_100], %159 {strides = array<i32>} : memref<1x4x256xf32, #tpu.memory_space<vmem>>, vector<1x4x16xf32>,
    %160 = vector.extract_strided_slice %123 {offsets = [0, 162], sizes = [4, 16], strides = [1, 1]} : vector<4x286xf32> to vector<4x16xf32>
    %c0_101 = arith.constant 0 : index
    %c0_102 = arith.constant 0 : index
    %c144_103 = arith.constant 144 : index
    %161 = vector.load %arg4[%c0_101, %c0_102, %c144_103] : memref<1x4x256xf32, #tpu.memory_space<vmem>>, vector<1x4x16xf32>
    %162 = vector.shape_cast %161 : vector<1x4x16xf32> to vector<4x16xf32>
    %163 = vector.shape_cast %160 : vector<4x16xf32> to vector<1x4x16xf32>
    tpu.vector_store %arg4[%c0_101, %c0_102, %c144_103], %163 {strides = array<i32>} : memref<1x4x256xf32, #tpu.memory_space<vmem>>, vector<1x4x16xf32>,
    %164 = vector.extract_strided_slice %123 {offsets = [0, 180], sizes = [4, 16], strides = [1, 1]} : vector<4x286xf32> to vector<4x16xf32>
    %c0_104 = arith.constant 0 : index
    %c0_105 = arith.constant 0 : index
    %c160_106 = arith.constant 160 : index
    %165 = vector.load %arg4[%c0_104, %c0_105, %c160_106] : memref<1x4x256xf32, #tpu.memory_space<vmem>>, vector<1x4x16xf32>
    %166 = vector.shape_cast %165 : vector<1x4x16xf32> to vector<4x16xf32>
    %167 = vector.shape_cast %164 : vector<4x16xf32> to vector<1x4x16xf32>
    tpu.vector_store %arg4[%c0_104, %c0_105, %c160_106], %167 {strides = array<i32>} : memref<1x4x256xf32, #tpu.memory_space<vmem>>, vector<1x4x16xf32>,
    %168 = vector.extract_strided_slice %123 {offsets = [0, 198], sizes = [4, 16], strides = [1, 1]} : vector<4x286xf32> to vector<4x16xf32>
    %c0_107 = arith.constant 0 : index
    %c0_108 = arith.constant 0 : index
    %c176_109 = arith.constant 176 : index
    %169 = vector.load %arg4[%c0_107, %c0_108, %c176_109] : memref<1x4x256xf32, #tpu.memory_space<vmem>>, vector<1x4x16xf32>
    %170 = vector.shape_cast %169 : vector<1x4x16xf32> to vector<4x16xf32>
    %171 = vector.shape_cast %168 : vector<4x16xf32> to vector<1x4x16xf32>
    tpu.vector_store %arg4[%c0_107, %c0_108, %c176_109], %171 {strides = array<i32>} : memref<1x4x256xf32, #tpu.memory_space<vmem>>, vector<1x4x16xf32>,
    %172 = vector.extract_strided_slice %123 {offsets = [0, 216], sizes = [4, 16], strides = [1, 1]} : vector<4x286xf32> to vector<4x16xf32>
    %c0_110 = arith.constant 0 : index
    %c0_111 = arith.constant 0 : index
    %c192_112 = arith.constant 192 : index
    %173 = vector.load %arg4[%c0_110, %c0_111, %c192_112] : memref<1x4x256xf32, #tpu.memory_space<vmem>>, vector<1x4x16xf32>
    %174 = vector.shape_cast %173 : vector<1x4x16xf32> to vector<4x16xf32>
    %175 = vector.shape_cast %172 : vector<4x16xf32> to vector<1x4x16xf32>
    tpu.vector_store %arg4[%c0_110, %c0_111, %c192_112], %175 {strides = array<i32>} : memref<1x4x256xf32, #tpu.memory_space<vmem>>, vector<1x4x16xf32>,
    %176 = vector.extract_strided_slice %123 {offsets = [0, 234], sizes = [4, 16], strides = [1, 1]} : vector<4x286xf32> to vector<4x16xf32>
    %c0_113 = arith.constant 0 : index
    %c0_114 = arith.constant 0 : index
    %c208_115 = arith.constant 208 : index
    %177 = vector.load %arg4[%c0_113, %c0_114, %c208_115] : memref<1x4x256xf32, #tpu.memory_space<vmem>>, vector<1x4x16xf32>
    %178 = vector.shape_cast %177 : vector<1x4x16xf32> to vector<4x16xf32>
    %179 = vector.shape_cast %176 : vector<4x16xf32> to vector<1x4x16xf32>
    tpu.vector_store %arg4[%c0_113, %c0_114, %c208_115], %179 {strides = array<i32>} : memref<1x4x256xf32, #tpu.memory_space<vmem>>, vector<1x4x16xf32>,
    %180 = vector.extract_strided_slice %123 {offsets = [0, 252], sizes = [4, 16], strides = [1, 1]} : vector<4x286xf32> to vector<4x16xf32>
    %c0_116 = arith.constant 0 : index
    %c0_117 = arith.constant 0 : index
    %c224_118 = arith.constant 224 : index
    %181 = vector.load %arg4[%c0_116, %c0_117, %c224_118] : memref<1x4x256xf32, #tpu.memory_space<vmem>>, vector<1x4x16xf32>
    %182 = vector.shape_cast %181 : vector<1x4x16xf32> to vector<4x16xf32>
    %183 = vector.shape_cast %180 : vector<4x16xf32> to vector<1x4x16xf32>
    tpu.vector_store %arg4[%c0_116, %c0_117, %c224_118], %183 {strides = array<i32>} : memref<1x4x256xf32, #tpu.memory_space<vmem>>, vector<1x4x16xf32>,
    %184 = vector.extract_strided_slice %123 {offsets = [0, 270], sizes = [4, 16], strides = [1, 1]} : vector<4x286xf32> to vector<4x16xf32>
    %c0_119 = arith.constant 0 : index
    %c0_120 = arith.constant 0 : index
    %c240_121 = arith.constant 240 : index
    %185 = vector.load %arg4[%c0_119, %c0_120, %c240_121] : memref<1x4x256xf32, #tpu.memory_space<vmem>>, vector<1x4x16xf32>
    %186 = vector.shape_cast %185 : vector<1x4x16xf32> to vector<4x16xf32>
    %187 = vector.shape_cast %184 : vector<4x16xf32> to vector<1x4x16xf32>
    tpu.vector_store %arg4[%c0_119, %c0_120, %c240_121], %187 {strides = array<i32>} : memref<1x4x256xf32, #tpu.memory_space<vmem>>, vector<1x4x16xf32>,
    return
  }
  func.func @transform_0(%arg0: i32) -> (i32, i32, i32) {
    %c0_i32 = arith.constant 0 : i32
    %c0_i32_0 = arith.constant 0 : i32
    %c0_i32_1 = arith.constant 0 : i32
    return %arg0, %c0_i32, %c0_i32_0 : i32, i32, i32
  }
  func.func @transform_1(%arg0: i32) -> (i32, i32) {
    %c0_i32 = arith.constant 0 : i32
    %c0_i32_0 = arith.constant 0 : i32
    %c0_i32_1 = arith.constant 0 : i32
    return %c0_i32, %c0_i32_0 : i32, i32
  }
  func.func @transform_2(%arg0: i32) -> (i32, i32) {
    %c0_i32 = arith.constant 0 : i32
    %c0_i32_0 = arith.constant 0 : i32
    %c0_i32_1 = arith.constant 0 : i32
    return %c0_i32, %c0_i32_0 : i32, i32
  }
  func.func @transform_3(%arg0: i32) -> (i32, i32, i32) {
    %c0_i32 = arith.constant 0 : i32
    %c0_i32_0 = arith.constant 0 : i32
    %c0_i32_1 = arith.constant 0 : i32
    return %arg0, %c0_i32, %c0_i32_0 : i32, i32, i32
  }
}

</mosaic_0001>

<llo_original>
// kernel: synthesis_residual_layer.1
$region0: #{synthesis_residual_layer.1}
  #allocation0 [shape = 'u32[]', space=smem, size = 0x4, offset = 0x4, fixed_abs, tag = 'smem constant byte address 0x4 - core index']
  #allocation1 [shape = 'u32[72,128]{1,0:T(1,128)}', space=vmem, size = 0x9000, scoped, tag = 'internal scratch']
  #allocation2 [shape = 'f32[4,324]{1,0:T(4,128)}', space=vmem, size = 0x1800, scoped, tag = 'scratch operand']
  %s0 = inlined_call_operand.vmem [shape: f32[2,4,256], index: 0, kind: input, shape index: {}]
  %s1 = inlined_call_operand.vmem [shape: f32[4,36], index: 1, kind: input, shape index: {}]
  %s2 = inlined_call_operand.vmem [shape: f32[4,1], index: 2, kind: input, shape index: {}]
  %s3 = inlined_call_operand.vmem [shape: f32[2,4,256], index: 3, kind: output, shape index: {}]
  %s4 = sld [smem:[#allocation0]]
  $region45: #{synthesis_residual_layer.1} parent=0
    _
  %s6 = ssub.s32 1, %s4
  %s7 = scalar_select 0, %s6, %s4
  loop: start=0, step=1, limit=4
  $region2: #{synthesis_residual_layer.1} parent=0 // loop_pre_header
    _
  $region3: #{synthesis_residual_layer.1} parent=0 // loop_header
    %s9 = sphi 0, %s13
    %p10 = scmp.ge.s32.totalorder %s9, 4
    %s19 = sphi 0, %s21
    %s22 = sphi 0, %s19
    %s23 = sphi 0, %s22
    %s39 = sphi 0, %s23
    %s43 = sphi 0, %s43
    %s45 = sphi 0, %s43
    %s46 = sphi 0, %s45
    %s60 = sphi 0, %s46
    %s64 = sphi 0, %s64
    %s66 = sphi 0, %s64
    %s67 = sphi 0, %s66
    %s81 = sphi 0, %s67
    %s87 = sphi 0, %s89
    %s90 = sphi 0, %s87
    %s91 = sphi 0, %s90
    %s107 = sphi 0, %s91
  $region4: #{synthesis_residual_layer.1} parent=0 // loop_header_branch
    %12 = sbr.rel (%p10) target = $region8
  $region5: #{synthesis_residual_layer.1} parent=0 // loop_body
    %s14 = ssub.s32 %s9, 1
    %s15 = ssub.s32 %s9, 2
    %s16 = sadd.s32 %s9, 1
    %s17 = ssub.s32 %s9, %s16
    %p18 = scmp.eq.s32.totalorder %s17, 0
    %s20 = sadd.s32 %s19, 1
    %s21 = scalar_select %p18, %s19, %s20
    %p24 = pneg %p18
    %p25 = scmp.eq.s32.totalorder %s9, 1
    %p26 = por %p24, %p25
    %p27 = scmp.ne.s32.totalorder %s19, %s22
    %p28 = scmp.eq.s32.totalorder %s9, 0
    %p29 = por %p27, %p28
    %p30 = scmp.ne.s32.totalorder %s19, %s22
    %p31 = scmp.eq.s32.totalorder %s14, 1
    %p32 = por %p30, %p31
    %p33 = scmp.ne.s32.totalorder %s22, %s23
    %p34 = scmp.eq.s32.totalorder %s14, 0
    %p35 = por %p33, %p34
    %p36 = scmp.ne.s32.totalorder %s22, %s23
    %p37 = scmp.eq.s32.totalorder %s15, 1
    %p38 = por %p36, %p37
    %p40 = scmp.ne.s32.totalorder %s23, %s39
    %p41 = scmp.eq.s32.totalorder %s15, 0
    %p42 = por %p40, %p41
    %s44 = sadd.s32 %s43, 1
    %p47 = scmp.eq.s32.totalorder %s9, 1
    %p48 = scmp.ne.s32.totalorder %s43, %s45
    %p49 = scmp.eq.s32.totalorder %s9, 0
    %p50 = por %p48, %p49
    %p51 = scmp.ne.s32.totalorder %s43, %s45
    %p52 = scmp.eq.s32.totalorder %s14, 1
    %p53 = por %p51, %p52
    %p54 = scmp.ne.s32.totalorder %s45, %s46
    %p55 = scmp.eq.s32.totalorder %s14, 0
    %p56 = por %p54, %p55
    %p57 = scmp.ne.s32.totalorder %s45, %s46
    %p58 = scmp.eq.s32.totalorder %s15, 1
    %p59 = por %p57, %p58
    %p61 = scmp.ne.s32.totalorder %s46, %s60
    %p62 = scmp.eq.s32.totalorder %s15, 0
    %p63 = por %p61, %p62
    %s65 = sadd.s32 %s64, 1
    %p68 = scmp.eq.s32.totalorder %s9, 1
    %p69 = scmp.ne.s32.totalorder %s64, %s66
    %p70 = scmp.eq.s32.totalorder %s9, 0
    %p71 = por %p69, %p70
    %p72 = scmp.ne.s32.totalorder %s64, %s66
    %p73 = scmp.eq.s32.totalorder %s14, 1
    %p74 = por %p72, %p73
    %p75 = scmp.ne.s32.totalorder %s66, %s67
    %p76 = scmp.eq.s32.totalorder %s14, 0
    %p77 = por %p75, %p76
    %p78 = scmp.ne.s32.totalorder %s66, %s67
    %p79 = scmp.eq.s32.totalorder %s15, 1
    %p80 = por %p78, %p79
    %p82 = scmp.ne.s32.totalorder %s67, %s81
    %p83 = scmp.eq.s32.totalorder %s15, 0
    %p84 = por %p82, %p83
    %s85 = ssub.s32 %s9, %s16
    %p86 = scmp.eq.s32.totalorder %s85, 0
    %s88 = sadd.s32 %s87, 1
    %s89 = scalar_select %p86, %s87, %s88
    %p92 = pneg %p86
    %p93 = scmp.eq.s32.totalorder %s9, 1
    %p94 = por %p92, %p93
    %p95 = scmp.ne.s32.totalorder %s87, %s90
    %p96 = scmp.eq.s32.totalorder %s9, 0
    %p97 = por %p95, %p96
    %p98 = scmp.ne.s32.totalorder %s87, %s90
    %p99 = scmp.eq.s32.totalorder %s14, 1
    %p100 = por %p98, %p99
    %p101 = scmp.ne.s32.totalorder %s90, %s91
    %p102 = scmp.eq.s32.totalorder %s14, 0
    %p103 = por %p101, %p102
    %p104 = scmp.ne.s32.totalorder %s90, %s91
    %p105 = scmp.eq.s32.totalorder %s15, 1
    %p106 = por %p104, %p105
    %p108 = scmp.ne.s32.totalorder %s91, %s107
    %p109 = scmp.eq.s32.totalorder %s15, 0
    %p110 = por %p108, %p109
    %p111 = scmp.le.s32.totalorder 1, %s9
    %p112 = scmp.lt.s32.totalorder %s9, 3
    %p113 = pnand %p111, %p112
    %p114 = pneg %p113
    // Predicated region
    $region9: #{synthesis_residual_layer.1} parent=5 // pred_check
      _
    $region10: #{synthesis_residual_layer.1} parent=5 // pred_check_branch
      %116 = sbr.rel (%p113) target = $region12
    $region11: #{synthesis_residual_layer.1} parent=5 // pred_region
      %s117 = ssub.s32 %s9, 1
      // Predicated region
      $region13: #{synthesis_residual_layer.1} parent=11 // pred_check
        %p118 = pneg %p56
      $region14: #{synthesis_residual_layer.1} parent=11 // pred_check_branch
        %120 = sbr.rel (%p118) target = $region16
      $region15: #{synthesis_residual_layer.1} parent=11 // pred_region
        _
      $region16: #{synthesis_residual_layer.1} parent=11 // pred_fallthru
        _
      // Predicated region
      $region17: #{synthesis_residual_layer.1} parent=11 // pred_check
        %p121 = pneg %p77
      $region18: #{synthesis_residual_layer.1} parent=11 // pred_check_branch
        %123 = sbr.rel (%p121) target = $region20
      $region19: #{synthesis_residual_layer.1} parent=11 // pred_region
        _
      $region20: #{synthesis_residual_layer.1} parent=11 // pred_fallthru
        _
    $region12: #{synthesis_residual_layer.1} parent=5 // pred_fallthru
      _
    %p124 = scmp.lt.s32.totalorder %s9, 2
    // Predicated region
    $region21: #{synthesis_residual_layer.1} parent=5 // pred_check
      %p125 = pneg %p124
    $region22: #{synthesis_residual_layer.1} parent=5 // pred_check_branch
      %127 = sbr.rel (%p125) target = $region24
    $region23: #{synthesis_residual_layer.1} parent=5 // pred_region
      // Predicated region
      $region25: #{synthesis_residual_layer.1} parent=23 // pred_check
        %p128 = pneg %p29
      $region26: #{synthesis_residual_layer.1} parent=23 // pred_check_branch
        %130 = sbr.rel (%p128) target = $region28
      $region27: #{synthesis_residual_layer.1} parent=23 // pred_region
        %p131 = scmp.lt.s32.totalorder %s9, 1
        %s132 = scalar_select %p131, %s9, 1
        %s133 = smul.addr %s132, 2
        %s134 = smul.addr %s133, 4
        %s135 = scalar_lea.vmem %s0, %s134
      $region28: #{synthesis_residual_layer.1} parent=23 // pred_fallthru
        _
    $region24: #{synthesis_residual_layer.1} parent=5 // pred_fallthru
      _
    %p136 = scmp.le.s32.totalorder 1, %s9
    %p137 = scmp.lt.s32.totalorder %s9, 3
    %p138 = pnand %p136, %p137
    %p139 = pneg %p138
    // Predicated region
    $region29: #{synthesis_residual_layer.1} parent=5 // pred_check
      _
    $region30: #{synthesis_residual_layer.1} parent=5 // pred_check_branch
      %141 = sbr.rel (%p138) target = $region32
    $region31: #{synthesis_residual_layer.1} parent=5 // pred_region
      %s142 = ssub.s32 %s9, 1
      %p143 = scmp.lt.s32.totalorder %s14, 1
      %s144 = scalar_select %p143, %s14, 1
      %s145 = smul.addr %s144, 2
      %s146 = smul.addr %s145, 4
      %s147 = scalar_lea.vmem %s0, %s146
      %p148 = pneg %p35
      %p149 = pneg %p32
      %p150 = pneg %p56
      %p151 = pneg %p53
      %p152 = pneg %p77
      %p153 = pneg %p74
      %p154 = pneg %p103
      %p155 = pneg %p100
      %p156 = scmp.lt.s32.totalorder %s14, 1
      %s157 = scalar_select %p156, %s14, 1
      %s158 = smul.addr %s157, 2
      %s159 = smul.addr %s158, 4
      %s160 = scalar_lea.vmem %s3, %s159
      %p161 = scmp.lt.s32.totalorder %s14, 1
      %s162 = scalar_select %p161, %s14, 1
      %s163 = smul.addr %s162, 2
      %s164 = smul.addr %s163, 4
      %s165 = scalar_lea.vmem %s0, %s164
      %p166 = scmp.lt.s32.totalorder %s14, 1
      %s167 = scalar_select %p166, %s14, 1
      %s168 = smul.addr %s167, 2
      %s169 = smul.addr %s168, 4
      %s170 = scalar_lea.vmem %s3, %s169
      %v171 = vld [vmem:[%s165] sm:$0xf]
      %173 = vst [vmem:[#allocation1] ss:$2 sm:$0xff] %v171
      %v174 = vld.sshfl [vmem:[#allocation1] sm:$0xff pattern:$0x75316420]
      %175 = vrot.lane.b32.xlu0 %v174, 1
      %v176 = vpop.permute.xlu0 %175
      %178 = vst [vmem:[#allocation1] ss:$2 sm:$0xff] %v171
      %v179 = vld.sshfl [vmem:[#allocation1] sm:$0xff pattern:$0x75316420]
      %180 = vrot.lane.b32.xlu0 %v179, 2
      %v181 = vpop.permute.xlu0 %180
      %vm183 = vcmask 7168
      %v184 = vsel %vm183, %v171, %v176
      %vm185 = vcmask 138240
      %v186 = vsel %vm185, %v184, %v181
      %vm187 = vcmask 142336
      %188 = vst.msk [vmem:[#allocation2] sm:$0xf] %vm187, %v186
      %v189 = vld [vmem:[%s165] sm:$0xf]
      %191 = vst [vmem:[#allocation1] ss:$2 sm:$0xff] %v189
      %v192 = vld.sshfl [vmem:[#allocation1] sm:$0xff pattern:$0x75316420]
      %193 = vrot.lane.b32.xlu0 %v192, 1
      %v194 = vpop.permute.xlu0 %193
      %196 = vst [vmem:[#allocation1] ss:$2 sm:$0xff] %v189
      %v197 = vld.sshfl [vmem:[#allocation1] sm:$0xff pattern:$0x75316420]
      %198 = vrot.lane.b32.xlu0 %v197, 2
      %v199 = vpop.permute.xlu0 %198
      %v201 = vsel %vm183, %v189, %v194
      %v202 = vsel %vm185, %v201, %v199
      %204 = vrot.lane.b32.xlu0 %v202, 18
      %v205 = vpop.permute.xlu0 %204
      %vm207 = vcmask 289936
      %208 = vst.msk [vmem:[#allocation2] sm:$0xf] %vm207, %v205
      %v209 = vld [vmem:[%s165] sm:$0xf]
      %211 = vst [vmem:[#allocation1] ss:$2 sm:$0xff] %v209
      %v212 = vld.sshfl [vmem:[#allocation1] sm:$0xff pattern:$0x75316420]
      %213 = vrot.lane.b32.xlu0 %v212, 112
      %v214 = vpop.permute.xlu0 %213
      %216 = vst [vmem:[#allocation1] ss:$2 sm:$0xff] %v209
      %v217 = vld.sshfl [vmem:[#allocation1] sm:$0xff pattern:$0x75316420]
      %218 = vrot.lane.b32.xlu0 %v217, 113
      %v219 = vpop.permute.xlu0 %218
      %221 = vst [vmem:[#allocation1] ss:$2 sm:$0xff] %v209
      %v222 = vld.sshfl [vmem:[#allocation1] sm:$0xff pattern:$0x75316420]
      %223 = vrot.lane.b32.xlu0 %v222, 114
      %v224 = vpop.permute.xlu0 %223
      %v226 = vsel %vm183, %v214, %v219
      %v227 = vsel %vm185, %v226, %v224
      %229 = vrot.lane.b32.xlu0 %v227, 36
      %v230 = vpop.permute.xlu0 %229
      %vm232 = vcmask 437536
      %233 = vst.msk [vmem:[#allocation2] sm:$0xf] %vm232, %v230
      %v234 = vld [vmem:[%s165] sm:$0xf]
      %236 = vst [vmem:[#allocation1] ss:$2 sm:$0xff] %v234
      %v237 = vld.sshfl [vmem:[#allocation1] sm:$0xff pattern:$0x75316420]
      %238 = vrot.lane.b32.xlu0 %v237, 96
      %v239 = vpop.permute.xlu0 %238
      %241 = vst [vmem:[#allocation1] ss:$2 sm:$0xff] %v234
      %v242 = vld.sshfl [vmem:[#allocation1] sm:$0xff pattern:$0x75316420]
      %243 = vrot.lane.b32.xlu0 %v242, 97
      %v244 = vpop.permute.xlu0 %243
      %246 = vst [vmem:[#allocation1] ss:$2 sm:$0xff] %v234
      %v247 = vld.sshfl [vmem:[#allocation1] sm:$0xff pattern:$0x75316420]
      %248 = vrot.lane.b32.xlu0 %v247, 98
      %v249 = vpop.permute.xlu0 %248
      %v251 = vsel %vm183, %v239, %v244
      %v252 = vsel %vm185, %v251, %v249
      %254 = vrot.lane.b32.xlu0 %v252, 54
      %v255 = vpop.permute.xlu0 %254
      %vm257 = vcmask 585136
      %258 = vst.msk [vmem:[#allocation2] sm:$0xf] %vm257, %v255
      %v259 = vld [vmem:[%s165] sm:$0xf]
      %261 = vst [vmem:[#allocation1] ss:$2 sm:$0xff] %v259
      %v262 = vld.sshfl [vmem:[#allocation1] sm:$0xff pattern:$0x75316420]
      %263 = vrot.lane.b32.xlu0 %v262, 80
      %v264 = vpop.permute.xlu0 %263
      %266 = vst [vmem:[#allocation1] ss:$2 sm:$0xff] %v259
      %v267 = vld.sshfl [vmem:[#allocation1] sm:$0xff pattern:$0x75316420]
      %268 = vrot.lane.b32.xlu0 %v267, 81
      %v269 = vpop.permute.xlu0 %268
      %271 = vst [vmem:[#allocation1] ss:$2 sm:$0xff] %v259
      %v272 = vld.sshfl [vmem:[#allocation1] sm:$0xff pattern:$0x75316420]
      %273 = vrot.lane.b32.xlu0 %v272, 82
      %v274 = vpop.permute.xlu0 %273
      %v276 = vsel %vm183, %v264, %v269
      %v277 = vsel %vm185, %v276, %v274
      %279 = vrot.lane.b32.xlu0 %v277, 72
      %v280 = vpop.permute.xlu0 %279
      %vm282 = vcmask 732736
      %283 = vst.msk [vmem:[#allocation2] sm:$0xf] %vm282, %v280
      %v284 = vld [vmem:[%s165] sm:$0xf]
      %286 = vst [vmem:[#allocation1] ss:$2 sm:$0xff] %v284
      %v287 = vld.sshfl [vmem:[#allocation1] sm:$0xff pattern:$0x75316420]
      %288 = vrot.lane.b32.xlu0 %v287, 64
      %v289 = vpop.permute.xlu0 %288
      %291 = vst [vmem:[#allocation1] ss:$2 sm:$0xff] %v284
      %v292 = vld.sshfl [vmem:[#allocation1] sm:$0xff pattern:$0x75316420]
      %293 = vrot.lane.b32.xlu0 %v292, 65
      %v294 = vpop.permute.xlu0 %293
      %296 = vst [vmem:[#allocation1] ss:$2 sm:$0xff] %v284
      %v297 = vld.sshfl [vmem:[#allocation1] sm:$0xff pattern:$0x75316420]
      %298 = vrot.lane.b32.xlu0 %v297, 66
      %v299 = vpop.permute.xlu0 %298
      %v301 = vsel %vm183, %v289, %v294
      %v302 = vsel %vm185, %v301, %v299
      %304 = vrot.lane.b32.xlu0 %v302, 90
      %v305 = vpop.permute.xlu0 %304
      %vm307 = vcmask 880336
      %308 = vst.msk [vmem:[#allocation2] sm:$0xf] %vm307, %v305
      %v309 = vld [vmem:[%s165] sm:$0xf]
      %311 = vst [vmem:[#allocation1] ss:$2 sm:$0xff] %v309
      %v312 = vld.sshfl [vmem:[#allocation1] sm:$0xff pattern:$0x75316420]
      %313 = vrot.lane.b32.xlu0 %v312, 48
      %v314 = vpop.permute.xlu0 %313
      %316 = vst [vmem:[#allocation1] ss:$2 sm:$0xff] %v309
      %v317 = vld.sshfl [vmem:[#allocation1] sm:$0xff pattern:$0x75316420]
      %318 = vrot.lane.b32.xlu0 %v317, 49
      %v319 = vpop.permute.xlu0 %318
      %321 = vst [vmem:[#allocation1] ss:$2 sm:$0xff] %v309
      %v322 = vld.sshfl [vmem:[#allocation1] sm:$0xff pattern:$0x75316420]
      %323 = vrot.lane.b32.xlu0 %v322, 50
      %v324 = vpop.permute.xlu0 %323
      %v326 = vsel %vm183, %v314, %v319
      %v327 = vsel %vm185, %v326, %v324
      %329 = vrot.lane.b32.xlu0 %v327, 108
      %v330 = vpop.permute.xlu0 %329
      %vm332 = vcmask 1027936
      %333 = vst.msk [vmem:[#allocation2] sm:$0xf] %vm332, %v330
      %v334 = vld [vmem:[%s165] sm:$0xf]
      %336 = vst [vmem:[#allocation1] ss:$2 sm:$0xff] %v334
      %v337 = vld.sshfl [vmem:[#allocation1] sm:$0xff pattern:$0x75316420]
      %338 = vrot.lane.b32.xlu0 %v337, 32
      %v339 = vpop.permute.xlu0 %338
      %341 = vst [vmem:[#allocation1] ss:$2 sm:$0xff] %v334
      %v342 = vld.sshfl [vmem:[#allocation1] sm:$0xff pattern:$0x75316420]
      %343 = vrot.lane.b32.xlu0 %v342, 33
      %v344 = vpop.permute.xlu0 %343
      %346 = vst [vmem:[#allocation1] ss:$2 sm:$0xff] %v334
      %v347 = vld.sshfl [vmem:[#allocation1] sm:$0xff pattern:$0x75316420]
      %348 = vrot.lane.b32.xlu0 %v347, 34
      %v349 = vpop.permute.xlu0 %348
      %v351 = vsel %vm183, %v339, %v344
      %v352 = vsel %vm185, %v351, %v349
      %354 = vrot.lane.b32.xlu0 %v352, 126
      %v355 = vpop.permute.xlu0 %354
      %v356 = vrot.slane %v355, 4
      %vm357 = vcmask 1031168
      %v358 = vsel %vm357, %v356, %v355
      %vm360 = vcmask 1044464
      %vm361 = vcmask 130052
      %vm362 = vmor %vm361, %vm360
      %363 = vst.msk [vmem:[#allocation2] sm:$0xff] %vm362, %v358
      %v364 = vld [vmem:[%s165] sm:$0xf]
      %366 = vst [vmem:[#allocation1] ss:$2 sm:$0xff] %v364
      %v367 = vld.sshfl [vmem:[#allocation1] sm:$0xff pattern:$0x75316420]
      %368 = vrot.lane.b32.xlu0 %v367, 16
      %v369 = vpop.permute.xlu0 %368
      %371 = vst [vmem:[#allocation1] ss:$2 sm:$0xff] %v364
      %v372 = vld.sshfl [vmem:[#allocation1] sm:$0xff pattern:$0x75316420]
      %373 = vrot.lane.b32.xlu0 %v372, 17
      %v374 = vpop.permute.xlu0 %373
      %376 = vst [vmem:[#allocation1] ss:$2 sm:$0xff] %v364
      %v377 = vld.sshfl [vmem:[#allocation1] sm:$0xff pattern:$0x75316420]
      %378 = vrot.lane.b32.xlu0 %v377, 18
      %v379 = vpop.permute.xlu0 %378
      %v381 = vsel %vm183, %v369, %v374
      %v382 = vsel %vm185, %v381, %v379
      %384 = vrot.lane.b32.xlu0 %v382, 16
      %v385 = vpop.permute.xlu0 %384
      %vm387 = vcmask 273536
      %388 = vst.msk [vmem:[#allocation2 + $0x4] sm:$0xf] %vm387, %v385
      %v389 = vld [vmem:[%s165 + $0x4] sm:$0xf]
      %391 = vst [vmem:[#allocation1] ss:$2 sm:$0xff] %v389
      %v392 = vld.sshfl [vmem:[#allocation1] sm:$0xff pattern:$0x75316420]
      %393 = vrot.lane.b32.xlu0 %v392, 1
      %v394 = vpop.permute.xlu0 %393
      %396 = vst [vmem:[#allocation1] ss:$2 sm:$0xff] %v389
      %v397 = vld.sshfl [vmem:[#allocation1] sm:$0xff pattern:$0x75316420]
      %398 = vrot.lane.b32.xlu0 %v397, 2
      %v399 = vpop.permute.xlu0 %398
      %v401 = vsel %vm183, %v389, %v394
      %v402 = vsel %vm185, %v401, %v399
      %404 = vrot.lane.b32.xlu0 %v402, 34
      %v405 = vpop.permute.xlu0 %404
      %vm407 = vcmask 421136
      %408 = vst.msk [vmem:[#allocation2 + $0x4] sm:$0xf] %vm407, %v405
      %v409 = vld [vmem:[%s165 + $0x4] sm:$0xf]
      %411 = vst [vmem:[#allocation1] ss:$2 sm:$0xff] %v409
      %v412 = vld.sshfl [vmem:[#allocation1] sm:$0xff pattern:$0x75316420]
      %413 = vrot.lane.b32.xlu0 %v412, 112
      %v414 = vpop.permute.xlu0 %413
      %416 = vst [vmem:[#allocation1] ss:$2 sm:$0xff] %v409
      %v417 = vld.sshfl [vmem:[#allocation1] sm:$0xff pattern:$0x75316420]
      %418 = vrot.lane.b32.xlu0 %v417, 113
      %v419 = vpop.permute.xlu0 %418
      %421 = vst [vmem:[#allocation1] ss:$2 sm:$0xff] %v409
      %v422 = vld.sshfl [vmem:[#allocation1] sm:$0xff pattern:$0x75316420]
      %423 = vrot.lane.b32.xlu0 %v422, 114
      %v424 = vpop.permute.xlu0 %423
      %v426 = vsel %vm183, %v414, %v419
      %v427 = vsel %vm185, %v426, %v424
      %429 = vrot.lane.b32.xlu0 %v427, 52
      %v430 = vpop.permute.xlu0 %429
      %vm432 = vcmask 568736
      %433 = vst.msk [vmem:[#allocation2 + $0x4] sm:$0xf] %vm432, %v430
      %v434 = vld [vmem:[%s165 + $0x4] sm:$0xf]
      %436 = vst [vmem:[#allocation1] ss:$2 sm:$0xff] %v434
      %v437 = vld.sshfl [vmem:[#allocation1] sm:$0xff pattern:$0x75316420]
      %438 = vrot.lane.b32.xlu0 %v437, 96
      %v439 = vpop.permute.xlu0 %438
      %441 = vst [vmem:[#allocation1] ss:$2 sm:$0xff] %v434
      %v442 = vld.sshfl [vmem:[#allocation1] sm:$0xff pattern:$0x75316420]
      %443 = vrot.lane.b32.xlu0 %v442, 97
      %v444 = vpop.permute.xlu0 %443
      %446 = vst [vmem:[#allocation1] ss:$2 sm:$0xff] %v434
      %v447 = vld.sshfl [vmem:[#allocation1] sm:$0xff pattern:$0x75316420]
      %448 = vrot.lane.b32.xlu0 %v447, 98
      %v449 = vpop.permute.xlu0 %448
      %v451 = vsel %vm183, %v439, %v444
      %v452 = vsel %vm185, %v451, %v449
      %454 = vrot.lane.b32.xlu0 %v452, 70
      %v455 = vpop.permute.xlu0 %454
      %vm457 = vcmask 716336
      %458 = vst.msk [vmem:[#allocation2 + $0x4] sm:$0xf] %vm457, %v455
      %v459 = vld [vmem:[%s165 + $0x4] sm:$0xf]
      %461 = vst [vmem:[#allocation1] ss:$2 sm:$0xff] %v459
      %v462 = vld.sshfl [vmem:[#allocation1] sm:$0xff pattern:$0x75316420]
      %463 = vrot.lane.b32.xlu0 %v462, 80
      %v464 = vpop.permute.xlu0 %463
      %466 = vst [vmem:[#allocation1] ss:$2 sm:$0xff] %v459
      %v467 = vld.sshfl [vmem:[#allocation1] sm:$0xff pattern:$0x75316420]
      %468 = vrot.lane.b32.xlu0 %v467, 81
      %v469 = vpop.permute.xlu0 %468
      %471 = vst [vmem:[#allocation1] ss:$2 sm:$0xff] %v459
      %v472 = vld.sshfl [vmem:[#allocation1] sm:$0xff pattern:$0x75316420]
      %473 = vrot.lane.b32.xlu0 %v472, 82
      %v474 = vpop.permute.xlu0 %473
      %v476 = vsel %vm183, %v464, %v469
      %v477 = vsel %vm185, %v476, %v474
      %479 = vrot.lane.b32.xlu0 %v477, 88
      %v480 = vpop.permute.xlu0 %479
      %vm482 = vcmask 863936
      %483 = vst.msk [vmem:[#allocation2 + $0x4] sm:$0xf] %vm482, %v480
      %v484 = vld [vmem:[%s165 + $0x4] sm:$0xf]
      %486 = vst [vmem:[#allocation1] ss:$2 sm:$0xff] %v484
      %v487 = vld.sshfl [vmem:[#allocation1] sm:$0xff pattern:$0x75316420]
      %488 = vrot.lane.b32.xlu0 %v487, 64
      %v489 = vpop.permute.xlu0 %488
      %491 = vst [vmem:[#allocation1] ss:$2 sm:$0xff] %v484
      %v492 = vld.sshfl [vmem:[#allocation1] sm:$0xff pattern:$0x75316420]
      %493 = vrot.lane.b32.xlu0 %v492, 65
      %v494 = vpop.permute.xlu0 %493
      %496 = vst [vmem:[#allocation1] ss:$2 sm:$0xff] %v484
      %v497 = vld.sshfl [vmem:[#allocation1] sm:$0xff pattern:$0x75316420]
      %498 = vrot.lane.b32.xlu0 %v497, 66
      %v499 = vpop.permute.xlu0 %498
      %v501 = vsel %vm183, %v489, %v494
      %v502 = vsel %vm185, %v501, %v499
      %504 = vrot.lane.b32.xlu0 %v502, 106
      %v505 = vpop.permute.xlu0 %504
      %vm507 = vcmask 1011536
      %508 = vst.msk [vmem:[#allocation2 + $0x4] sm:$0xf] %vm507, %v505
      %v509 = vld [vmem:[%s165 + $0x4] sm:$0xf]
      %511 = vst [vmem:[#allocation1] ss:$2 sm:$0xff] %v509
      %v512 = vld.sshfl [vmem:[#allocation1] sm:$0xff pattern:$0x75316420]
      %513 = vrot.lane.b32.xlu0 %v512, 48
      %v514 = vpop.permute.xlu0 %513
      %516 = vst [vmem:[#allocation1] ss:$2 sm:$0xff] %v509
      %v517 = vld.sshfl [vmem:[#allocation1] sm:$0xff pattern:$0x75316420]
      %518 = vrot.lane.b32.xlu0 %v517, 49
      %v519 = vpop.permute.xlu0 %518
      %521 = vst [vmem:[#allocation1] ss:$2 sm:$0xff] %v509
      %v522 = vld.sshfl [vmem:[#allocation1] sm:$0xff pattern:$0x75316420]
      %523 = vrot.lane.b32.xlu0 %v522, 50
      %v524 = vpop.permute.xlu0 %523
      %v526 = vsel %vm183, %v514, %v519
      %v527 = vsel %vm185, %v526, %v524
      %529 = vrot.lane.b32.xlu0 %v527, 124
      %v530 = vpop.permute.xlu0 %529
      %v531 = vrot.slane %v530, 4
      %vm532 = vcmask 1014784
      %v533 = vsel %vm532, %v531, %v530
      %vm535 = vcmask 1044448
      %vm536 = vcmask 113668
      %vm537 = vmor %vm536, %vm535
      %538 = vst.msk [vmem:[#allocation2 + $0x4] sm:$0xff] %vm537, %v533
      %v539 = vld [vmem:[%s165 + $0x4] sm:$0xf]
      %541 = vst [vmem:[#allocation1] ss:$2 sm:$0xff] %v539
      %v542 = vld.sshfl [vmem:[#allocation1] sm:$0xff pattern:$0x75316420]
      %543 = vrot.lane.b32.xlu0 %v542, 32
      %v544 = vpop.permute.xlu0 %543
      %546 = vst [vmem:[#allocation1] ss:$2 sm:$0xff] %v539
      %v547 = vld.sshfl [vmem:[#allocation1] sm:$0xff pattern:$0x75316420]
      %548 = vrot.lane.b32.xlu0 %v547, 33
      %v549 = vpop.permute.xlu0 %548
      %551 = vst [vmem:[#allocation1] ss:$2 sm:$0xff] %v539
      %v552 = vld.sshfl [vmem:[#allocation1] sm:$0xff pattern:$0x75316420]
      %553 = vrot.lane.b32.xlu0 %v552, 34
      %v554 = vpop.permute.xlu0 %553
      %v556 = vsel %vm183, %v544, %v549
      %v557 = vsel %vm185, %v556, %v554
      %559 = vrot.lane.b32.xlu0 %v557, 14
      %v560 = vpop.permute.xlu0 %559
      %vm562 = vcmask 257136
      %563 = vst.msk [vmem:[#allocation2 + $0x8] sm:$0xf] %vm562, %v560
      %v564 = vld [vmem:[%s165 + $0x4] sm:$0xf]
      %566 = vst [vmem:[#allocation1] ss:$2 sm:$0xff] %v564
      %v567 = vld.sshfl [vmem:[#allocation1] sm:$0xff pattern:$0x75316420]
      %568 = vrot.lane.b32.xlu0 %v567, 16
      %v569 = vpop.permute.xlu0 %568
      %571 = vst [vmem:[#allocation1] ss:$2 sm:$0xff] %v564
      %v572 = vld.sshfl [vmem:[#allocation1] sm:$0xff pattern:$0x75316420]
      %573 = vrot.lane.b32.xlu0 %v572, 17
      %v574 = vpop.permute.xlu0 %573
      %576 = vst [vmem:[#allocation1] ss:$2 sm:$0xff] %v564
      %v577 = vld.sshfl [vmem:[#allocation1] sm:$0xff pattern:$0x75316420]
      %578 = vrot.lane.b32.xlu0 %v577, 18
      %v579 = vpop.permute.xlu0 %578
      %v581 = vsel %vm183, %v569, %v574
      %v582 = vsel %vm185, %v581, %v579
      %584 = vrot.lane.b32.xlu0 %v582, 32
      %v585 = vpop.permute.xlu0 %584
      %vm587 = vcmask 404736
      %588 = vst.msk [vmem:[#allocation2 + $0x8] sm:$0xf] %vm587, %v585
      %v589 = vld [vmem:[%s165 + $0x4] sm:$0xf]
      %591 = vst [vmem:[#allocation1] ss:$2 sm:$0xff] %v589
      %v592 = vld.sshfl [vmem:[#allocation1] sm:$0xff pattern:$0x75316420]
      %593 = vrot.lane.b32.xlu0 %v592, 16
      %v594 = vpop.permute.xlu0 %593
      %596 = vst [vmem:[#allocation1] ss:$2 sm:$0xff] %v589
      %v597 = vld.sshfl [vmem:[#allocation1] sm:$0xff pattern:$0x75316420]
      %598 = vrot.lane.b32.xlu0 %v597, 17
      %v599 = vpop.permute.xlu0 %598
      %601 = vst [vmem:[#allocation1] ss:$2 sm:$0xff] %v589
      %v602 = vld.sshfl [vmem:[#allocation1] sm:$0xff pattern:$0x75316420]
      %603 = vrot.lane.b32.xlu0 %v602, 18
      %v604 = vpop.permute.xlu0 %603
      %v606 = vsel %vm183, %v594, %v599
      %v607 = vsel %vm185, %v606, %v604
      %609 = vrot.lane.b32.xlu0 %v607, 50
      %v610 = vpop.permute.xlu0 %609
      %vm612 = vcmask 552336
      %613 = vst.msk [vmem:[#allocation2 + $0x8] sm:$0xf] %vm612, %v610
      %v614 = vld [vmem:[#allocation2] sm:$0xff]
      %v615 = vld [vmem:[#allocation2 + $0x8] sm:$0xf]
      %618 = vst [vmem:[#allocation1] ss:$2 sm:$0xff] %v614
      %s619 = scalar_lea.vmem [#allocation1], 16
      %620 = vst [vmem:[%s619] ss:$2 sm:$0xff] %v615
      %v621 = vld.sshfl [vmem:[#allocation1] sm:$0xff pattern:$0x75316420]
      %v622 = vld.sshfl [vmem:[#allocation1 + $0x8] sm:$0xff pattern:$0x75316420]
      %v623 = vld.sshfl [vmem:[#allocation1 + $0x10] sm:$0xff pattern:$0x75316420]
      %s627 = scalar_lea.vmem [#allocation1], 1
      %628 = vst [vmem:[%s627] ss:$2 sm:$0xff] %v614
      %s629 = scalar_lea.vmem [#allocation1], 17
      %630 = vst [vmem:[%s629] ss:$2 sm:$0xff] %v615
      %v631 = vld.sshfl [vmem:[#allocation1] sm:$0xff pattern:$0x75316420]
      %v632 = vld.sshfl [vmem:[#allocation1 + $0x8] sm:$0xff pattern:$0x75316420]
      %v633 = vld.sshfl [vmem:[#allocation1 + $0x10] sm:$0xff pattern:$0x75316420]
      %634 = vrot.lane.b32.xlu0 %v631, 127
      %v635 = vpop.permute.xlu0 %634
      %636 = vrot.lane.b32.xlu0 %v632, 127
      %v637 = vpop.permute.xlu0 %636
      %638 = vrot.lane.b32.xlu0 %v633, 127
      %v639 = vpop.permute.xlu0 %638
      %vm640 = vcmask 1039360
      %v641 = vsel %vm640, %v635, %v637
      %v642 = vsel %vm640, %v637, %v639
      %646 = vst [vmem:[#allocation1] ss:$2 sm:$0xff] %v614
      %s647 = scalar_lea.vmem [#allocation1], 16
      %648 = vst [vmem:[%s647] ss:$2 sm:$0xff] %v615
      %v649 = vld.sshfl [vmem:[#allocation1] sm:$0xff pattern:$0x75316420]
      %v650 = vld.sshfl [vmem:[#allocation1 + $0x8] sm:$0xff pattern:$0x75316420]
      %v651 = vld.sshfl [vmem:[#allocation1 + $0x10] sm:$0xff pattern:$0x75316420]
      %652 = vrot.lane.b32.xlu0 %v649, 126
      %v653 = vpop.permute.xlu0 %652
      %654 = vrot.lane.b32.xlu0 %v650, 126
      %v655 = vpop.permute.xlu0 %654
      %656 = vrot.lane.b32.xlu0 %v651, 126
      %v657 = vpop.permute.xlu0 %656
      %v658 = vsel %vm357, %v653, %v655
      %v659 = vsel %vm357, %v655, %v657
      %s663 = scalar_lea.vmem [#allocation1], 1
      %664 = vst [vmem:[%s663] ss:$2 sm:$0xff] %v614
      %s665 = scalar_lea.vmem [#allocation1], 17
      %666 = vst [vmem:[%s665] ss:$2 sm:$0xff] %v615
      %v667 = vld.sshfl [vmem:[#allocation1] sm:$0xff pattern:$0x75316420]
      %v668 = vld.sshfl [vmem:[#allocation1 + $0x8] sm:$0xff pattern:$0x75316420]
      %v669 = vld.sshfl [vmem:[#allocation1 + $0x10] sm:$0xff pattern:$0x75316420]
      %670 = vrot.lane.b32.xlu0 %v667, 110
      %v671 = vpop.permute.xlu0 %670
      %672 = vrot.lane.b32.xlu0 %v668, 110
      %v673 = vpop.permute.xlu0 %672
      %674 = vrot.lane.b32.xlu0 %v669, 110
      %v675 = vpop.permute.xlu0 %674
      %vm676 = vcmask 900096
      %v677 = vsel %vm676, %v671, %v673
      %v678 = vsel %vm676, %v673, %v675
      %682 = vst [vmem:[#allocation1] ss:$2 sm:$0xff] %v614
      %s683 = scalar_lea.vmem [#allocation1], 16
      %684 = vst [vmem:[%s683] ss:$2 sm:$0xff] %v615
      %v685 = vld.sshfl [vmem:[#allocation1] sm:$0xff pattern:$0x75316420]
      %v686 = vld.sshfl [vmem:[#allocation1 + $0x8] sm:$0xff pattern:$0x75316420]
      %v687 = vld.sshfl [vmem:[#allocation1 + $0x10] sm:$0xff pattern:$0x75316420]
      %688 = vrot.lane.b32.xlu0 %v685, 109
      %v689 = vpop.permute.xlu0 %688
      %690 = vrot.lane.b32.xlu0 %v686, 109
      %v691 = vpop.permute.xlu0 %690
      %692 = vrot.lane.b32.xlu0 %v687, 109
      %v693 = vpop.permute.xlu0 %692
      %vm694 = vcmask 891904
      %v695 = vsel %vm694, %v689, %v691
      %v696 = vsel %vm694, %v691, %v693
      %s700 = scalar_lea.vmem [#allocation1], 1
      %701 = vst [vmem:[%s700] ss:$2 sm:$0xff] %v614
      %s702 = scalar_lea.vmem [#allocation1], 17
      %703 = vst [vmem:[%s702] ss:$2 sm:$0xff] %v615
      %v704 = vld.sshfl [vmem:[#allocation1] sm:$0xff pattern:$0x75316420]
      %v705 = vld.sshfl [vmem:[#allocation1 + $0x8] sm:$0xff pattern:$0x75316420]
      %v706 = vld.sshfl [vmem:[#allocation1 + $0x10] sm:$0xff pattern:$0x75316420]
      %707 = vrot.lane.b32.xlu0 %v704, 108
      %v708 = vpop.permute.xlu0 %707
      %709 = vrot.lane.b32.xlu0 %v705, 108
      %v710 = vpop.permute.xlu0 %709
      %711 = vrot.lane.b32.xlu0 %v706, 108
      %v712 = vpop.permute.xlu0 %711
      %vm713 = vcmask 883712
      %v714 = vsel %vm713, %v708, %v710
      %v715 = vsel %vm713, %v710, %v712
      %719 = vst [vmem:[#allocation1] ss:$2 sm:$0xff] %v614
      %s720 = scalar_lea.vmem [#allocation1], 16
      %721 = vst [vmem:[%s720] ss:$2 sm:$0xff] %v615
      %v722 = vld.sshfl [vmem:[#allocation1] sm:$0xff pattern:$0x75316420]
      %v723 = vld.sshfl [vmem:[#allocation1 + $0x8] sm:$0xff pattern:$0x75316420]
      %v724 = vld.sshfl [vmem:[#allocation1 + $0x10] sm:$0xff pattern:$0x75316420]
      %725 = vrot.lane.b32.xlu0 %v722, 92
      %v726 = vpop.permute.xlu0 %725
      %727 = vrot.lane.b32.xlu0 %v723, 92
      %v728 = vpop.permute.xlu0 %727
      %729 = vrot.lane.b32.xlu0 %v724, 92
      %v730 = vpop.permute.xlu0 %729
      %vm731 = vcmask 752640
      %v732 = vsel %vm731, %v726, %v728
      %v733 = vsel %vm731, %v728, %v730
      %s737 = scalar_lea.vmem [#allocation1], 1
      %738 = vst [vmem:[%s737] ss:$2 sm:$0xff] %v614
      %s739 = scalar_lea.vmem [#allocation1], 17
      %740 = vst [vmem:[%s739] ss:$2 sm:$0xff] %v615
      %v741 = vld.sshfl [vmem:[#allocation1] sm:$0xff pattern:$0x75316420]
      %v742 = vld.sshfl [vmem:[#allocation1 + $0x8] sm:$0xff pattern:$0x75316420]
      %v743 = vld.sshfl [vmem:[#allocation1 + $0x10] sm:$0xff pattern:$0x75316420]
      %744 = vrot.lane.b32.xlu0 %v741, 91
      %v745 = vpop.permute.xlu0 %744
      %746 = vrot.lane.b32.xlu0 %v742, 91
      %v747 = vpop.permute.xlu0 %746
      %748 = vrot.lane.b32.xlu0 %v743, 91
      %v749 = vpop.permute.xlu0 %748
      %vm750 = vcmask 744448
      %v751 = vsel %vm750, %v745, %v747
      %v752 = vsel %vm750, %v747, %v749
      %756 = vst [vmem:[#allocation1] ss:$2 sm:$0xff] %v614
      %s757 = scalar_lea.vmem [#allocation1], 16
      %758 = vst [vmem:[%s757] ss:$2 sm:$0xff] %v615
      %v759 = vld.sshfl [vmem:[#allocation1] sm:$0xff pattern:$0x75316420]
      %v760 = vld.sshfl [vmem:[#allocation1 + $0x8] sm:$0xff pattern:$0x75316420]
      %v761 = vld.sshfl [vmem:[#allocation1 + $0x10] sm:$0xff pattern:$0x75316420]
      %762 = vrot.lane.b32.xlu0 %v759, 90
      %v763 = vpop.permute.xlu0 %762
      %764 = vrot.lane.b32.xlu0 %v760, 90
      %v765 = vpop.permute.xlu0 %764
      %766 = vrot.lane.b32.xlu0 %v761, 90
      %v767 = vpop.permute.xlu0 %766
      %vm768 = vcmask 736256
      %v769 = vsel %vm768, %v763, %v765
      %v770 = vsel %vm768, %v765, %v767
      %vm771 = vcmask 1043456
      %v772 = vsel %vm771, %v621, %v641
      %v773 = vsel %vm771, %v622, %v642
      %v774 = vsel %vm771, %v623, %v639
      %v775 = vsel %vm771, %v658, %v677
      %v776 = vsel %vm771, %v659, %v678
      %v777 = vsel %vm771, %v657, %v675
      %v778 = vsel %vm771, %v695, %v714
      %v779 = vsel %vm771, %v696, %v715
      %v780 = vsel %vm771, %v693, %v712
      %v781 = vsel %vm771, %v732, %v751
      %v782 = vsel %vm771, %v733, %v752
      %v783 = vsel %vm771, %v730, %v749
      %v784 = vld [vmem:[%s1] sm:$0xf]
      %v785 = vld [vmem:[%s2] sm:$0xf]
      %787 = vset.pattern.permute.xlu0 0
      %788 = vperm.xlu0 %787, %v785
      %v789 = vpop.permute.xlu0 %788
      %vm791 = vcmask 293888
      %v793 = vsel %vm791, %v784, 0
      %v795 = vsel %vm771, %v769, 0
      %v797 = vsel %vm771, %v770, 0
      %v799 = vsel %vm771, %v767, 0
      %801 = vmatpush.msra.mxu0 0.0
      %802 = vmatpush.msra.mxu0 0.0
      %803 = vmatpush.msra.mxu0 0.0
      %804 = vmatpush.msra.mxu0 0.0
      %805 = vmatpush.msra.mxu0 0.0
      %806 = vmatpush.msra.mxu0 0.0
      %807 = vmatpush.msra.mxu0 0.0
      %808 = vmatpush.msra.mxu0 0.0
      %809 = vmatpush.msra.mxu0 0.0
      %810 = vmatpush.msra.mxu0 0.0
      %811 = vmatpush.msra.mxu0 0.0
      %812 = vmatpush.msra.mxu0 %v795
      %813 = vmatpush.msra.mxu0 %v781
      %814 = vmatpush.msra.mxu0 %v778
      %815 = vmatpush.msra.mxu0 %v775
      %816 = vmatpush.msra.mxu0 %v772
      %817 = vmatmul.f32.gmra.mxu0 %v793
      %v818 = vpop.f32.mrf.mxu0
      %v819 = vadd.f32 %v789, %v818
      %820 = vdwg.mxu0
      %821 = vmatpush.msra.mxu0 0.0
      %822 = vmatpush.msra.mxu0 0.0
      %823 = vmatpush.msra.mxu0 0.0
      %824 = vmatpush.msra.mxu0 0.0
      %825 = vmatpush.msra.mxu0 0.0
      %826 = vmatpush.msra.mxu0 0.0
      %827 = vmatpush.msra.mxu0 0.0
      %828 = vmatpush.msra.mxu0 0.0
      %829 = vmatpush.msra.mxu0 0.0
      %830 = vmatpush.msra.mxu0 0.0
      %831 = vmatpush.msra.mxu0 0.0
      %832 = vmatpush.msra.mxu0 %v797
      %833 = vmatpush.msra.mxu0 %v782
      %834 = vmatpush.msra.mxu0 %v779
      %835 = vmatpush.msra.mxu0 %v776
      %836 = vmatpush.msra.mxu0 %v773
      %837 = vmatmul.f32.gmra.mxu0 %v793
      %v838 = vpop.f32.mrf.mxu0
      %v839 = vadd.f32 %v789, %v838
      %840 = vdwg.mxu0
      %841 = vmatpush.msra.mxu0 0.0
      %842 = vmatpush.msra.mxu0 0.0
      %843 = vmatpush.msra.mxu0 0.0
      %844 = vmatpush.msra.mxu0 0.0
      %845 = vmatpush.msra.mxu0 0.0
      %846 = vmatpush.msra.mxu0 0.0
      %847 = vmatpush.msra.mxu0 0.0
      %848 = vmatpush.msra.mxu0 0.0
      %849 = vmatpush.msra.mxu0 0.0
      %850 = vmatpush.msra.mxu0 0.0
      %851 = vmatpush.msra.mxu0 0.0
      %852 = vmatpush.msra.mxu0 %v799
      %853 = vmatpush.msra.mxu0 %v783
      %854 = vmatpush.msra.mxu0 %v780
      %855 = vmatpush.msra.mxu0 %v777
      %856 = vmatpush.msra.mxu0 %v774
      %857 = vmatmul.f32.gmra.mxu0 %v793
      %v858 = vpop.f32.mrf.mxu0
      %v859 = vadd.f32 %v789, %v858
      %860 = vdwg.mxu0
      %861 = vst [vmem:[#allocation1] ss:$2 sm:$0xff] %v614
      %s862 = scalar_lea.vmem [#allocation1], 16
      %863 = vst [vmem:[%s862] ss:$2 sm:$0xff] %v615
      %v864 = vld.sshfl [vmem:[#allocation1] sm:$0xff pattern:$0x75316420]
      %v865 = vld.sshfl [vmem:[#allocation1 + $0x8] sm:$0xff pattern:$0x75316420]
      %v866 = vld.sshfl [vmem:[#allocation1 + $0x10] sm:$0xff pattern:$0x75316420]
      %867 = vrot.lane.b32.xlu0 %v864, 109
      %v868 = vpop.permute.xlu0 %867
      %869 = vrot.lane.b32.xlu0 %v865, 109
      %v870 = vpop.permute.xlu0 %869
      %871 = vrot.lane.b32.xlu0 %v866, 109
      %v872 = vpop.permute.xlu0 %871
      %v873 = vsel %vm694, %v868, %v870
      %v874 = vsel %vm694, %v870, %v872
      %v878 = vadd.f32 %v819, %v873
      %v879 = vadd.f32 %v839, %v874
      %v880 = vadd.f32 %v859, %v872
      %vm881 = vcmask 125952
      %882 = vst.msk [vmem:[%s170] sm:$0xf] %vm881, %v878
      %884 = vrot.lane.b32.xlu0 %v878, 126
      %v885 = vpop.permute.xlu0 %884
      %vm887 = vcmask 257152
      %888 = vst.msk [vmem:[%s170] sm:$0xf] %vm887, %v885
      %889 = vrot.lane.b32.xlu0 %v878, 124
      %v890 = vpop.permute.xlu0 %889
      %vm892 = vcmask 388352
      %893 = vst.msk [vmem:[%s170] sm:$0xf] %vm892, %v890
      %894 = vrot.lane.b32.xlu0 %v878, 122
      %v895 = vpop.permute.xlu0 %894
      %vm897 = vcmask 519552
      %898 = vst.msk [vmem:[%s170] sm:$0xf] %vm897, %v895
      %899 = vrot.lane.b32.xlu0 %v878, 120
      %v900 = vpop.permute.xlu0 %899
      %vm902 = vcmask 650752
      %903 = vst.msk [vmem:[%s170] sm:$0xf] %vm902, %v900
      %904 = vrot.lane.b32.xlu0 %v878, 118
      %v905 = vpop.permute.xlu0 %904
      %vm907 = vcmask 781952
      %908 = vst.msk [vmem:[%s170] sm:$0xf] %vm907, %v905
      %909 = vrot.lane.b32.xlu0 %v878, 116
      %v910 = vpop.permute.xlu0 %909
      %vm912 = vcmask 913152
      %913 = vst.msk [vmem:[%s170] sm:$0xf] %vm912, %v910
      %v915 = vrot.slane %v879, 4
      %v916 = vsel %vm771, %v878, %v915
      %917 = vrot.lane.b32.xlu0 %v916, 114
      %v918 = vpop.permute.xlu0 %917
      %v919 = vrot.slane %v918, 4
      %vm920 = vcmask 932864
      %v921 = vsel %vm920, %v918, %v919
      %vm923 = vcmask 1044352
      %924 = vst.msk [vmem:[%s170] sm:$0xf] %vm923, %v921
      %925 = vrot.lane.b32.xlu0 %v879, 112
      %v926 = vpop.permute.xlu0 %925
      %928 = vst.msk [vmem:[%s170 + $0x4] sm:$0xf] %vm881, %v926
      %929 = vrot.lane.b32.xlu0 %v879, 110
      %v930 = vpop.permute.xlu0 %929
      %932 = vst.msk [vmem:[%s170 + $0x4] sm:$0xf] %vm887, %v930
      %933 = vrot.lane.b32.xlu0 %v879, 108
      %v934 = vpop.permute.xlu0 %933
      %936 = vst.msk [vmem:[%s170 + $0x4] sm:$0xf] %vm892, %v934
      %937 = vrot.lane.b32.xlu0 %v879, 106
      %v938 = vpop.permute.xlu0 %937
      %940 = vst.msk [vmem:[%s170 + $0x4] sm:$0xf] %vm897, %v938
      %941 = vrot.lane.b32.xlu0 %v879, 104
      %v942 = vpop.permute.xlu0 %941
      %944 = vst.msk [vmem:[%s170 + $0x4] sm:$0xf] %vm902, %v942
      %945 = vrot.lane.b32.xlu0 %v879, 102
      %v946 = vpop.permute.xlu0 %945
      %948 = vst.msk [vmem:[%s170 + $0x4] sm:$0xf] %vm907, %v946
      %v950 = vrot.slane %v880, 4
      %v951 = vsel %vm771, %v879, %v950
      %952 = vrot.lane.b32.xlu0 %v951, 100
      %v953 = vpop.permute.xlu0 %952
      %v954 = vrot.slane %v953, 4
      %vm955 = vcmask 818176
      %v956 = vsel %vm955, %v953, %v954
      %958 = vst.msk [vmem:[%s170 + $0x4] sm:$0xf] %vm912, %v956
      %959 = vrot.lane.b32.xlu0 %v880, 98
      %v960 = vpop.permute.xlu0 %959
      %962 = vst.msk [vmem:[%s170 + $0x4] sm:$0xf] %vm923, %v960
      %p963 = scmp.lt.s32.totalorder %s14, 1
      %s964 = scalar_select %p963, %s14, 1
      %s965 = smul.addr %s964, 2
      %s966 = smul.addr %s965, 4
      %s967 = scalar_lea.vmem %s3, %s966
      // Predicated region
      $region33: #{synthesis_residual_layer.1} parent=31 // pred_check
        %p968 = pneg %p100
      $region34: #{synthesis_residual_layer.1} parent=31 // pred_check_branch
        %970 = sbr.rel (%p968) target = $region36
      $region35: #{synthesis_residual_layer.1} parent=31 // pred_region
        _
      $region36: #{synthesis_residual_layer.1} parent=31 // pred_fallthru
        _
    $region32: #{synthesis_residual_layer.1} parent=5 // pred_fallthru
      _
    %p971 = scmp.le.s32.totalorder 2, %s9
    // Predicated region
    $region37: #{synthesis_residual_layer.1} parent=5 // pred_check
      %p972 = pneg %p971
    $region38: #{synthesis_residual_layer.1} parent=5 // pred_check_branch
      %974 = sbr.rel (%p972) target = $region40
    $region39: #{synthesis_residual_layer.1} parent=5 // pred_region
      %s975 = ssub.s32 %s9, 2
      // Predicated region
      $region41: #{synthesis_residual_layer.1} parent=39 // pred_check
        %p976 = pneg %p106
      $region42: #{synthesis_residual_layer.1} parent=39 // pred_check_branch
        %978 = sbr.rel (%p976) target = $region44
      $region43: #{synthesis_residual_layer.1} parent=39 // pred_region
        %p979 = scmp.lt.s32.totalorder %s15, 1
        %s980 = scalar_select %p979, %s15, 1
        %s981 = smul.addr %s980, 2
        %s982 = smul.addr %s981, 4
        %s983 = scalar_lea.vmem %s3, %s982
      $region44: #{synthesis_residual_layer.1} parent=39 // pred_fallthru
        _
    $region40: #{synthesis_residual_layer.1} parent=5 // pred_fallthru
      _
  $region6: #{synthesis_residual_layer.1} parent=0 // loop_footer
    %s13 = sadd.s32 1, %s9
  $region7: #{synthesis_residual_layer.1} parent=0 // loop_footer_branch
    %8 = sbr.rel target = $region3
  $region8: #{synthesis_residual_layer.1} parent=0 // loop_exit
    _

</llo_original>
